<compile_context>
chip_gen: v5e
topology: v5e:2x2
jax: 0.10.0
libtpu: 0.0.40
codegen_flags: <defaults>
</compile_context>

<pallas_src>
import numpy as np
import jax
import jax.numpy as jnp
from jax.experimental import pallas as pl
from jax.experimental.pallas import tpu as pltpu


# ------------------------------- small helpers ------------------------------- #

def _round_up(x, m):
    return ((x + m - 1) // m) * m


def _pick_block_batch(n, rows_per_sample, target_m=256):
    """Pick samples-per-grid-step B: keep >=2 grid steps (v7x megacore) when possible,
    and grow B until the conv1 matmul M dim (B*rows_per_sample) reaches ~target_m."""
    divs = [d for d in range(1, n + 1) if n % d == 0]
    if n >= 2:
        two_step = [d for d in divs if n // d >= 2]
        if two_step:
            divs = two_step
    for d in divs:                       # ascending
        if d * rows_per_sample >= target_m:
            return d
    return divs[-1]


# ------------------------------ fused Pallas kernel ------------------------------ #

def _make_fused_kernel(B, ho_wo, p2, k1p, n_taps=9):
    """conv1 (one fat matmul) + ReLU + conv2 (gather matmul + 9 tap matmuls) + ReLU
    + consolidated 2x2 avgpool matmul.  Everything stays in vregs/VMEM."""

    def kernel(p1_ref, w1_ref, b1_ref, s2_ref, w2_ref, b2_ref, pool_ref, o_ref):
        # ---- conv1: single matmul over the whole B-sample block ----------------
        x = p1_ref[...].reshape(B * ho_wo, k1p)                       # bf16
        y1 = jnp.dot(x, w1_ref[...], preferred_element_type=jnp.float32)
        y1 = jnp.maximum(y1 + b1_ref[...], 0.0)                       # [B*ho_wo, CP] f32
        y1 = y1.astype(jnp.bfloat16)                                  # exact bf16 reuse below

        s2 = s2_ref[...]                                              # [9*p2, ho_wo] bf16 (0/1)
        b2 = b2_ref[...]                                              # [1, CP] f32
        pool = pool_ref[...]                                          # [hp_wp, p2] f32

        for b in range(B):
            yb = y1[b * ho_wo:(b + 1) * ho_wo]                        # [ho_wo, CP] bf16 (aligned)
            # conv2 im2col (incl. zero padding at the borders) as ONE selection matmul.
            g = jnp.dot(s2, yb, preferred_element_type=jnp.float32)   # [9*p2, CP] exact copy/0
            g = g.astype(jnp.bfloat16)
            # 9 tap matmuls, f32 accumulation in vregs.
            # TODO(synk): on v7x this sum could accumulate in the MRB via
            # pltpu.matmul_push_rhs / matmul_acc_lhs / matmul_pop.
            acc = jnp.dot(g[0:p2], w2_ref[0], preferred_element_type=jnp.float32)
            for t in range(1, n_taps):
                acc = acc + jnp.dot(g[t * p2:(t + 1) * p2], w2_ref[t],
                                    preferred_element_type=jnp.float32)
            y2 = jnp.maximum(acc + b2, 0.0)                           # [p2, CP] f32
            # consolidated 2x2 average pool as one tiny matmul.
            o_ref[b] = jnp.dot(pool, y2,
                               preferred_element_type=jnp.float32).astype(o_ref.dtype)

    return kernel


# ---------------------------------- wrapper ---------------------------------- #

def classifier_module_2conv_forward(x_list, params):
    x = x_list[-1]                                   # NCHW (torch layout)
    x = jnp.transpose(x, (0, 2, 3, 1))               # -> NHWC (channels on lanes)
    N, H, W, Cin = x.shape
    assert H % 4 == 0 and W % 4 == 0
    Ho, Wo = H // 2, W // 2                          # conv1 output
    ho2, wo2 = Ho // 2, Wo // 2                      # conv2 output
    Hp, Wp = ho2 // 2, wo2 // 2                      # pooled output
    Cmid = params["b1"].shape[0]
    CP = _round_up(Cmid, 128)                        # lane-dense channels
    K1 = 9 * Cin
    K1p = _round_up(K1, 8)
    P2 = ho2 * wo2

    # ---- conv1 im2col in the wrapper: taps folded into the contraction dim -----
    xb = x.astype(jnp.bfloat16)
    xp = jnp.pad(xb, ((0, 0), (1, 1), (1, 1), (0, 0)))
    tap_slices = []
    for dy in range(3):
        for dx in range(3):
            t = xp[:, dy:dy + 2 * Ho:2, dx:dx + 2 * Wo:2, :]          # [N, Ho, Wo, Cin]
            tap_slices.append(t.reshape(N, Ho * Wo, Cin))
    patches1 = jnp.concatenate(tap_slices, axis=-1)                   # [N, Ho*Wo, 9*Cin]
    if K1p != K1:
        patches1 = jnp.pad(patches1, ((0, 0), (0, 0), (0, K1p - K1)))

    # ---- fold BN scale into weights; zero-pad channels to CP -------------------
    w1 = params["w1"] * params["s1"][None, None, None, :]             # [3,3,Cin,Cmid]
    w1 = w1.reshape(K1, Cmid)
    w1 = jnp.pad(w1, ((0, K1p - K1), (0, CP - Cmid))).astype(jnp.bfloat16)
    b1 = jnp.pad(params["b1"], (0, CP - Cmid)).reshape(1, CP).astype(jnp.float32)

    w2 = params["w2"] * params["s2"][None, None, None, :]             # [3,3,Cmid,Cmid]
    w2 = jnp.pad(w2, ((0, 0), (0, 0), (0, CP - Cmid), (0, CP - Cmid)))
    w2 = w2.reshape(9, CP, CP).astype(jnp.bfloat16)
    b2 = jnp.pad(params["b2"], (0, CP - Cmid)).reshape(1, CP).astype(jnp.float32)

    # ---- conv2 tap-gather selection matrix (0/1; zero rows = conv padding) -----
    s2 = np.zeros((9 * P2, Ho * Wo), np.float32)
    for dy in range(3):
        for dx in range(3):
            t = dy * 3 + dx
            for oh in range(ho2):
                for ow in range(wo2):
                    i, j = 2 * oh + dy - 1, 2 * ow + dx - 1
                    if 0 <= i < Ho and 0 <= j < Wo:
                        s2[t * P2 + oh * wo2 + ow, i * Wo + j] = 1.0
    s2 = jnp.asarray(s2, jnp.bfloat16)

    # ---- consolidated 2x2 average-pooling matrix --------------------------------
    pool = np.zeros((Hp * Wp, P2), np.float32)
    for ph in range(Hp):
        for pw in range(Wp):
            for dh in range(2):
                for dw in range(2):
                    pool[ph * Wp + pw, (2 * ph + dh) * wo2 + (2 * pw + dw)] = 0.25
    pool = jnp.asarray(pool)

    # ---- one fused pallas_call ---------------------------------------------------
    B = _pick_block_batch(N, Ho * Wo)
    grid = (N // B,)
    kernel = _make_fused_kernel(B, Ho * Wo, P2, K1p)

    in_specs = [
        pl.BlockSpec((B, Ho * Wo, K1p), lambda i: (i, 0, 0)),   # conv1 patches (per step)
        pl.BlockSpec((K1p, CP), lambda i: (0, 0)),              # w1 (resident)
        pl.BlockSpec((1, CP), lambda i: (0, 0)),                # b1
        pl.BlockSpec((9 * P2, Ho * Wo), lambda i: (0, 0)),      # conv2 gather matrix
        pl.BlockSpec((9, CP, CP), lambda i: (0, 0, 0)),         # w2 per-tap
        pl.BlockSpec((1, CP), lambda i: (0, 0)),                # b2
        pl.BlockSpec((Hp * Wp, P2), lambda i: (0, 0)),          # pooling matrix
    ]
    out_spec = pl.BlockSpec((B, Hp * Wp, CP), lambda i: (i, 0, 0))
    out_shape = jax.ShapeDtypeStruct((N, Hp * Wp, CP), jnp.float32)

    flops = int(2 * N * (Ho * Wo * K1p * CP            # conv1
                         + 9 * P2 * Ho * Wo * CP       # conv2 gather
                         + 9 * P2 * CP * CP            # conv2 taps
                         + Hp * Wp * P2 * CP))         # pool
    bytes_accessed = int(
        N * Ho * Wo * K1p * 2 + K1p * CP * 2 + 9 * CP * CP * 2
        + 9 * P2 * Ho * Wo * 2 + 2 * CP * 4 + Hp * Wp * P2 * 4
        + N * Hp * Wp * CP * 4)

    h = pl.pallas_call(
        kernel,
        out_shape=out_shape,
        grid=grid,
        in_specs=in_specs,
        out_specs=out_spec,
        compiler_params=pltpu.CompilerParams(
            dimension_semantics=("parallel",),
            vmem_limit_bytes=32 * 1024 * 1024),
        cost_estimate=pl.CostEstimate(
            flops=flops, transcendentals=0, bytes_accessed=bytes_accessed),
    )(patches1, w1, b1, s2, w2, b2, pool)

    # Tail: drop channel padding and reproduce torch's NCHW .view(N, -1) order.
    # TODO(synk): have the downstream consumer accept the NHWC / CP-padded layout to
    # drop these three tiny XLA relayouts on a few KiB.
    h = jnp.transpose(h, (0, 2, 1))[:, :Cmid, :]                 # [N, Cmid, Hp*Wp]
    return h.reshape(N, Cmid * Hp * Wp)


# --------------------------- plain-JAX reference ----------------------------- #

def ref_forward(x_list, params):
    x = jnp.transpose(x_list[-1], (0, 2, 3, 1))

    def cbr(x, w, s, b):
        y = jax.lax.conv_general_dilated(
            x, w, (2, 2), [(1, 1), (1, 1)],
            dimension_numbers=("NHWC", "HWIO", "NHWC"))
        return jnp.maximum(y * s + b, 0.0)

    h = cbr(x, params["w1"], params["s1"], params["b1"])
    h = cbr(h, params["w2"], params["s2"], params["b2"])
    N, H, W, C = h.shape
    h = h.reshape(N, H // 2, 2, W // 2, 2, C).mean(axis=(2, 4))
    h = jnp.transpose(h, (0, 3, 1, 2))
    return h.reshape(N, -1)


# ----------------------------------- main ------------------------------------ #

def make_params(key, cin, cmid):
    eps = 1e-5
    ks = jax.random.split(key, 10)

    def bn_fold(kg, kb, km, kv, c):
        gamma = jax.random.uniform(kg, (c,), jnp.float32, 0.5, 1.5)
        beta = 0.1 * jax.random.normal(kb, (c,), jnp.float32)
        mean = 0.1 * jax.random.normal(km, (c,), jnp.float32)
        var = jax.random.uniform(kv, (c,), jnp.float32, 0.5, 1.5)
        scale = gamma / jnp.sqrt(var + eps)
        bias = beta - mean * scale
        return scale, bias

    w1 = 0.1 * jax.random.normal(ks[0], (3, 3, cin, cmid), jnp.float32)
    s1, b1 = bn_fold(ks[1], ks[2], ks[3], ks[4], cmid)
    w2 = 0.1 * jax.random.normal(ks[5], (3, 3, cmid, cmid), jnp.float32)
    s2, b2 = bn_fold(ks[6], ks[7], ks[8], ks[9], cmid)
    return {"w1": w1, "s1": s1, "b1": b1, "w2": w2, "s2": s2, "b2": b2}


if __name__ == "__main__":
    key = jax.random.PRNGKey(0)
    k_x0, k_x1, k_p = jax.random.split(key, 3)

    N, Cin, H, W = 2, 4, 16, 16
    Cmid = 32  # small stand-in for MSDNet interChannels=128 (padded to 128 lanes inside)

    # x is a list of feature maps; forward only uses x[-1] (NCHW).
    x0 = jax.random.normal(k_x0, (N, Cin * 2, H * 2, W * 2), jnp.float32)
    x1 = jax.random.normal(k_x1, (N, Cin, H, W), jnp.float32)
    x_list = [x0, x1]

    params = make_params(k_p, Cin, Cmid)

    out = jax.block_until_ready(classifier_module_2conv_forward(x_list, params))
    ref = jax.block_until_ready(ref_forward(x_list, params))

    assert out.shape == (N, Cmid * (H // 8) * (W // 8)), out.shape
    # bf16 MXU inputs -> looser tolerance than pure-f32.
    np.testing.assert_allclose(np.asarray(out), np.asarray(ref),
                               rtol=3e-2, atol=3e-2)
    print("KERNEL_OK")
</pallas_src>

<mosaic_0001>
module attributes {stable_mosaic.version = 11 : i64} {
  func.func @kernel(%arg0: i32, %arg1: memref<1x64x40xbf16, #tpu.memory_space<vmem>>, %arg2: memref<40x128xbf16, #tpu.memory_space<vmem>>, %arg3: memref<1x128xf32, #tpu.memory_space<vmem>>, %arg4: memref<144x64xbf16, #tpu.memory_space<vmem>>, %arg5: memref<9x128x128xbf16, #tpu.memory_space<vmem>>, %arg6: memref<1x128xf32, #tpu.memory_space<vmem>>, %arg7: memref<4x16xf32, #tpu.memory_space<vmem>>, %arg8: memref<1x4x128xf32, #tpu.memory_space<vmem>>) attributes {dimension_semantics = [#tpu.dimension_semantics<parallel>], iteration_bounds = array<i64: 2>, scalar_prefetch = 0 : i64, scratch_operands = 0 : i64, tpu.core_type = #tpu.core_type<tc>, window_params = [{transform_indices = @transform_0, window_bounds = array<i64: 1, 64, 40>}, {pipeline_mode = #tpu.pipeline_mode<synchronous>, transform_indices = @transform_1, window_bounds = array<i64: 40, 128>}, {pipeline_mode = #tpu.pipeline_mode<synchronous>, transform_indices = @transform_2, window_bounds = array<i64: 1, 128>}, {pipeline_mode = #tpu.pipeline_mode<synchronous>, transform_indices = @transform_3, window_bounds = array<i64: 144, 64>}, {pipeline_mode = #tpu.pipeline_mode<synchronous>, transform_indices = @transform_4, window_bounds = array<i64: 9, 128, 128>}, {pipeline_mode = #tpu.pipeline_mode<synchronous>, transform_indices = @transform_5, window_bounds = array<i64: 1, 128>}, {pipeline_mode = #tpu.pipeline_mode<synchronous>, transform_indices = @transform_6, window_bounds = array<i64: 4, 16>}, {transform_indices = @transform_7, window_bounds = array<i64: 1, 4, 128>}]} {
    %c0 = arith.constant 0 : index
    %c0_0 = arith.constant 0 : index
    %c0_1 = arith.constant 0 : index
    %0 = vector.load %arg1[%c0, %c0_0, %c0_1] : memref<1x64x40xbf16, #tpu.memory_space<vmem>>, vector<1x64x40xbf16>
    %1 = vector.shape_cast %0 : vector<1x64x40xbf16> to vector<64x40xbf16>
    %c0_2 = arith.constant 0 : index
    %c0_3 = arith.constant 0 : index
    %2 = vector.load %arg2[%c0_2, %c0_3] : memref<40x128xbf16, #tpu.memory_space<vmem>>, vector<40x128xbf16>
    %cst = arith.constant dense<0.000000e+00> : vector<64x128xf32>
    %3 = tpu.matmul %1, %2, %cst {dimension_numbers = #tpu.dot_dimension_numbers<[1], [0], [0], [1], [0, 0, 1, 1], [], []>} : vector<64x40xbf16>, vector<40x128xbf16>, vector<64x128xf32> -> vector<64x128xf32>
    %c0_4 = arith.constant 0 : index
    %c0_5 = arith.constant 0 : index
    %4 = vector.load %arg3[%c0_4, %c0_5] : memref<1x128xf32, #tpu.memory_space<vmem>>, vector<1x128xf32>
    %5 = vector.broadcast %4 : vector<1x128xf32> to vector<64x128xf32>
    %6 = arith.addf %3, %5 : vector<64x128xf32>
    %cst_6 = arith.constant 0.000000e+00 : f32
    %7 = vector.broadcast %cst_6 : f32 to vector<64x128xf32>
    %8 = arith.maximumf %6, %7 : vector<64x128xf32>
    %9 = arith.truncf %8 : vector<64x128xf32> to vector<64x128xbf16>
    %c0_7 = arith.constant 0 : index
    %c0_8 = arith.constant 0 : index
    %10 = vector.load %arg4[%c0_7, %c0_8] : memref<144x64xbf16, #tpu.memory_space<vmem>>, vector<144x64xbf16>
    %c0_9 = arith.constant 0 : index
    %c0_10 = arith.constant 0 : index
    %11 = vector.load %arg6[%c0_9, %c0_10] : memref<1x128xf32, #tpu.memory_space<vmem>>, vector<1x128xf32>
    %c0_11 = arith.constant 0 : index
    %c0_12 = arith.constant 0 : index
    %12 = vector.load %arg7[%c0_11, %c0_12] : memref<4x16xf32, #tpu.memory_space<vmem>>, vector<4x16xf32>
    %cst_13 = arith.constant dense<0.000000e+00> : vector<144x128xf32>
    %13 = tpu.matmul %10, %9, %cst_13 {dimension_numbers = #tpu.dot_dimension_numbers<[1], [0], [0], [1], [0, 0, 1, 1], [], []>} : vector<144x64xbf16>, vector<64x128xbf16>, vector<144x128xf32> -> vector<144x128xf32>
    %14 = arith.truncf %13 : vector<144x128xf32> to vector<144x128xbf16>
    %15 = vector.extract_strided_slice %14 {offsets = [0, 0], sizes = [16, 128], strides = [1, 1]} : vector<144x128xbf16> to vector<16x128xbf16>
    %c0_14 = arith.constant 0 : index
    %c0_15 = arith.constant 0 : index
    %c0_16 = arith.constant 0 : index
    %16 = vector.load %arg5[%c0_14, %c0_15, %c0_16] : memref<9x128x128xbf16, #tpu.memory_space<vmem>>, vector<1x128x128xbf16>
    %17 = vector.shape_cast %16 : vector<1x128x128xbf16> to vector<128x128xbf16>
    %cst_17 = arith.constant dense<0.000000e+00> : vector<16x128xf32>
    %18 = tpu.matmul %15, %17, %cst_17 {dimension_numbers = #tpu.dot_dimension_numbers<[1], [0], [0], [1], [0, 0, 1, 1], [], []>} : vector<16x128xbf16>, vector<128x128xbf16>, vector<16x128xf32> -> vector<16x128xf32>
    %19 = vector.extract_strided_slice %14 {offsets = [16, 0], sizes = [16, 128], strides = [1, 1]} : vector<144x128xbf16> to vector<16x128xbf16>
    %c1 = arith.constant 1 : index
    %c0_18 = arith.constant 0 : index
    %c0_19 = arith.constant 0 : index
    %20 = vector.load %arg5[%c1, %c0_18, %c0_19] : memref<9x128x128xbf16, #tpu.memory_space<vmem>>, vector<1x128x128xbf16>
    %21 = vector.shape_cast %20 : vector<1x128x128xbf16> to vector<128x128xbf16>
    %cst_20 = arith.constant dense<0.000000e+00> : vector<16x128xf32>
    %22 = tpu.matmul %19, %21, %cst_20 {dimension_numbers = #tpu.dot_dimension_numbers<[1], [0], [0], [1], [0, 0, 1, 1], [], []>} : vector<16x128xbf16>, vector<128x128xbf16>, vector<16x128xf32> -> vector<16x128xf32>
    %23 = arith.addf %18, %22 : vector<16x128xf32>
    %24 = vector.extract_strided_slice %14 {offsets = [32, 0], sizes = [16, 128], strides = [1, 1]} : vector<144x128xbf16> to vector<16x128xbf16>
    %c2 = arith.constant 2 : index
    %c0_21 = arith.constant 0 : index
    %c0_22 = arith.constant 0 : index
    %25 = vector.load %arg5[%c2, %c0_21, %c0_22] : memref<9x128x128xbf16, #tpu.memory_space<vmem>>, vector<1x128x128xbf16>
    %26 = vector.shape_cast %25 : vector<1x128x128xbf16> to vector<128x128xbf16>
    %cst_23 = arith.constant dense<0.000000e+00> : vector<16x128xf32>
    %27 = tpu.matmul %24, %26, %cst_23 {dimension_numbers = #tpu.dot_dimension_numbers<[1], [0], [0], [1], [0, 0, 1, 1], [], []>} : vector<16x128xbf16>, vector<128x128xbf16>, vector<16x128xf32> -> vector<16x128xf32>
    %28 = arith.addf %23, %27 : vector<16x128xf32>
    %29 = vector.extract_strided_slice %14 {offsets = [48, 0], sizes = [16, 128], strides = [1, 1]} : vector<144x128xbf16> to vector<16x128xbf16>
    %c3 = arith.constant 3 : index
    %c0_24 = arith.constant 0 : index
    %c0_25 = arith.constant 0 : index
    %30 = vector.load %arg5[%c3, %c0_24, %c0_25] : memref<9x128x128xbf16, #tpu.memory_space<vmem>>, vector<1x128x128xbf16>
    %31 = vector.shape_cast %30 : vector<1x128x128xbf16> to vector<128x128xbf16>
    %cst_26 = arith.constant dense<0.000000e+00> : vector<16x128xf32>
    %32 = tpu.matmul %29, %31, %cst_26 {dimension_numbers = #tpu.dot_dimension_numbers<[1], [0], [0], [1], [0, 0, 1, 1], [], []>} : vector<16x128xbf16>, vector<128x128xbf16>, vector<16x128xf32> -> vector<16x128xf32>
    %33 = arith.addf %28, %32 : vector<16x128xf32>
    %34 = vector.extract_strided_slice %14 {offsets = [64, 0], sizes = [16, 128], strides = [1, 1]} : vector<144x128xbf16> to vector<16x128xbf16>
    %c4 = arith.constant 4 : index
    %c0_27 = arith.constant 0 : index
    %c0_28 = arith.constant 0 : index
    %35 = vector.load %arg5[%c4, %c0_27, %c0_28] : memref<9x128x128xbf16, #tpu.memory_space<vmem>>, vector<1x128x128xbf16>
    %36 = vector.shape_cast %35 : vector<1x128x128xbf16> to vector<128x128xbf16>
    %cst_29 = arith.constant dense<0.000000e+00> : vector<16x128xf32>
    %37 = tpu.matmul %34, %36, %cst_29 {dimension_numbers = #tpu.dot_dimension_numbers<[1], [0], [0], [1], [0, 0, 1, 1], [], []>} : vector<16x128xbf16>, vector<128x128xbf16>, vector<16x128xf32> -> vector<16x128xf32>
    %38 = arith.addf %33, %37 : vector<16x128xf32>
    %39 = vector.extract_strided_slice %14 {offsets = [80, 0], sizes = [16, 128], strides = [1, 1]} : vector<144x128xbf16> to vector<16x128xbf16>
    %c5 = arith.constant 5 : index
    %c0_30 = arith.constant 0 : index
    %c0_31 = arith.constant 0 : index
    %40 = vector.load %arg5[%c5, %c0_30, %c0_31] : memref<9x128x128xbf16, #tpu.memory_space<vmem>>, vector<1x128x128xbf16>
    %41 = vector.shape_cast %40 : vector<1x128x128xbf16> to vector<128x128xbf16>
    %cst_32 = arith.constant dense<0.000000e+00> : vector<16x128xf32>
    %42 = tpu.matmul %39, %41, %cst_32 {dimension_numbers = #tpu.dot_dimension_numbers<[1], [0], [0], [1], [0, 0, 1, 1], [], []>} : vector<16x128xbf16>, vector<128x128xbf16>, vector<16x128xf32> -> vector<16x128xf32>
    %43 = arith.addf %38, %42 : vector<16x128xf32>
    %44 = vector.extract_strided_slice %14 {offsets = [96, 0], sizes = [16, 128], strides = [1, 1]} : vector<144x128xbf16> to vector<16x128xbf16>
    %c6 = arith.constant 6 : index
    %c0_33 = arith.constant 0 : index
    %c0_34 = arith.constant 0 : index
    %45 = vector.load %arg5[%c6, %c0_33, %c0_34] : memref<9x128x128xbf16, #tpu.memory_space<vmem>>, vector<1x128x128xbf16>
    %46 = vector.shape_cast %45 : vector<1x128x128xbf16> to vector<128x128xbf16>
    %cst_35 = arith.constant dense<0.000000e+00> : vector<16x128xf32>
    %47 = tpu.matmul %44, %46, %cst_35 {dimension_numbers = #tpu.dot_dimension_numbers<[1], [0], [0], [1], [0, 0, 1, 1], [], []>} : vector<16x128xbf16>, vector<128x128xbf16>, vector<16x128xf32> -> vector<16x128xf32>
    %48 = arith.addf %43, %47 : vector<16x128xf32>
    %49 = vector.extract_strided_slice %14 {offsets = [112, 0], sizes = [16, 128], strides = [1, 1]} : vector<144x128xbf16> to vector<16x128xbf16>
    %c7 = arith.constant 7 : index
    %c0_36 = arith.constant 0 : index
    %c0_37 = arith.constant 0 : index
    %50 = vector.load %arg5[%c7, %c0_36, %c0_37] : memref<9x128x128xbf16, #tpu.memory_space<vmem>>, vector<1x128x128xbf16>
    %51 = vector.shape_cast %50 : vector<1x128x128xbf16> to vector<128x128xbf16>
    %cst_38 = arith.constant dense<0.000000e+00> : vector<16x128xf32>
    %52 = tpu.matmul %49, %51, %cst_38 {dimension_numbers = #tpu.dot_dimension_numbers<[1], [0], [0], [1], [0, 0, 1, 1], [], []>} : vector<16x128xbf16>, vector<128x128xbf16>, vector<16x128xf32> -> vector<16x128xf32>
    %53 = arith.addf %48, %52 : vector<16x128xf32>
    %54 = vector.extract_strided_slice %14 {offsets = [128, 0], sizes = [16, 128], strides = [1, 1]} : vector<144x128xbf16> to vector<16x128xbf16>
    %c8 = arith.constant 8 : index
    %c0_39 = arith.constant 0 : index
    %c0_40 = arith.constant 0 : index
    %55 = vector.load %arg5[%c8, %c0_39, %c0_40] : memref<9x128x128xbf16, #tpu.memory_space<vmem>>, vector<1x128x128xbf16>
    %56 = vector.shape_cast %55 : vector<1x128x128xbf16> to vector<128x128xbf16>
    %cst_41 = arith.constant dense<0.000000e+00> : vector<16x128xf32>
    %57 = tpu.matmul %54, %56, %cst_41 {dimension_numbers = #tpu.dot_dimension_numbers<[1], [0], [0], [1], [0, 0, 1, 1], [], []>} : vector<16x128xbf16>, vector<128x128xbf16>, vector<16x128xf32> -> vector<16x128xf32>
    %58 = arith.addf %53, %57 : vector<16x128xf32>
    %59 = vector.broadcast %11 : vector<1x128xf32> to vector<16x128xf32>
    %60 = arith.addf %58, %59 : vector<16x128xf32>
    %cst_42 = arith.constant 0.000000e+00 : f32
    %61 = vector.broadcast %cst_42 : f32 to vector<16x128xf32>
    %62 = arith.maximumf %60, %61 : vector<16x128xf32>
    %cst_43 = arith.constant dense<0.000000e+00> : vector<4x128xf32>
    %63 = tpu.matmul %12, %62, %cst_43 {dimension_numbers = #tpu.dot_dimension_numbers<[1], [0], [0], [1], [0, 0, 1, 1], [], []>} : vector<4x16xf32>, vector<16x128xf32>, vector<4x128xf32> -> vector<4x128xf32>
    %c0_44 = arith.constant 0 : index
    %c0_45 = arith.constant 0 : index
    %c0_46 = arith.constant 0 : index
    %64 = vector.load %arg8[%c0_44, %c0_45, %c0_46] : memref<1x4x128xf32, #tpu.memory_space<vmem>>, vector<1x4x128xf32>
    %65 = vector.shape_cast %64 : vector<1x4x128xf32> to vector<4x128xf32>
    %66 = vector.shape_cast %63 : vector<4x128xf32> to vector<1x4x128xf32>
    tpu.vector_store %arg8[%c0_44, %c0_45, %c0_46], %66 {strides = array<i32>} : memref<1x4x128xf32, #tpu.memory_space<vmem>>, vector<1x4x128xf32>,
    return
  }
  func.func @transform_0(%arg0: i32) -> (i32, i32, i32) {
    %c0_i32 = arith.constant 0 : i32
    %c0_i32_0 = arith.constant 0 : i32
    %c0_i32_1 = arith.constant 0 : i32
    return %arg0, %c0_i32, %c0_i32_0 : i32, i32, i32
  }
  func.func @transform_1(%arg0: i32) -> (i32, i32) {
    %c0_i32 = arith.constant 0 : i32
    %c0_i32_0 = arith.constant 0 : i32
    %c0_i32_1 = arith.constant 0 : i32
    return %c0_i32, %c0_i32_0 : i32, i32
  }
  func.func @transform_2(%arg0: i32) -> (i32, i32) {
    %c0_i32 = arith.constant 0 : i32
    %c0_i32_0 = arith.constant 0 : i32
    %c0_i32_1 = arith.constant 0 : i32
    return %c0_i32, %c0_i32_0 : i32, i32
  }
  func.func @transform_3(%arg0: i32) -> (i32, i32) {
    %c0_i32 = arith.constant 0 : i32
    %c0_i32_0 = arith.constant 0 : i32
    %c0_i32_1 = arith.constant 0 : i32
    return %c0_i32, %c0_i32_0 : i32, i32
  }
  func.func @transform_4(%arg0: i32) -> (i32, i32, i32) {
    %c0_i32 = arith.constant 0 : i32
    %c0_i32_0 = arith.constant 0 : i32
    %c0_i32_1 = arith.constant 0 : i32
    %c0_i32_2 = arith.constant 0 : i32
    return %c0_i32, %c0_i32_0, %c0_i32_1 : i32, i32, i32
  }
  func.func @transform_5(%arg0: i32) -> (i32, i32) {
    %c0_i32 = arith.constant 0 : i32
    %c0_i32_0 = arith.constant 0 : i32
    %c0_i32_1 = arith.constant 0 : i32
    return %c0_i32, %c0_i32_0 : i32, i32
  }
  func.func @transform_6(%arg0: i32) -> (i32, i32) {
    %c0_i32 = arith.constant 0 : i32
    %c0_i32_0 = arith.constant 0 : i32
    %c0_i32_1 = arith.constant 0 : i32
    return %c0_i32, %c0_i32_0 : i32, i32
  }
  func.func @transform_7(%arg0: i32) -> (i32, i32, i32) {
    %c0_i32 = arith.constant 0 : i32
    %c0_i32_0 = arith.constant 0 : i32
    %c0_i32_1 = arith.constant 0 : i32
    return %arg0, %c0_i32, %c0_i32_0 : i32, i32, i32
  }
}

</mosaic_0001>

<llo_original>
// kernel: tpu_custom_call.1
$region0: #{tpu_custom_call.1}
  #allocation0 [shape = 'u32[]', space=smem, size = 0x4, offset = 0x4, fixed_abs, tag = 'smem constant byte address 0x4 - core index']
  #allocation1 [shape = 'u32[72,128]{1,0:T(1,128)}', space=vmem, size = 0x9000, scoped, tag = 'internal scratch']
  %s0 = inlined_call_operand.vmem [shape: bf16[2,64,40], index: 0, kind: input, shape index: {}]
  %s1 = inlined_call_operand.vmem [shape: bf16[40,128], index: 1, kind: input, shape index: {}]
  %s2 = inlined_call_operand.vmem [shape: f32[1,128], index: 2, kind: input, shape index: {}]
  %s3 = inlined_call_operand.vmem [shape: bf16[144,64], index: 3, kind: input, shape index: {}]
  %s4 = inlined_call_operand.hbm [shape: bf16[9,128,128], index: 4, kind: input, shape index: {}]
  %s5 = inlined_call_operand.vmem [shape: f32[1,128], index: 5, kind: input, shape index: {}]
  %s6 = inlined_call_operand.vmem [shape: f32[4,16], index: 6, kind: input, shape index: {}]
  %s7 = inlined_call_operand.hbm [shape: f32[2,4,128], index: 7, kind: output, shape index: {}]
  %s8 = sld [smem:[#allocation0]]
  $region65: #{tpu_custom_call.1} parent=0
    _
  %s10 = ssub.s32 1, %s8
  %s11 = scalar_select 0, %s10, %s8
  $region1: #{tpu_custom_call.1} parent=0
    #allocation2 [shape = 'u8[294912]{0}', space=vmem, size = 0x48000, scoped, tag = 'input window, operand 4, single buffered']
    #allocation3 [shape = 's32[2]{0}', space=sflag, size = 0x8, scoped, tag = 'scoped memory for tpu_custom_call.1']
    #allocation4 [shape = 's32[2]{0}', space=sflag, size = 0x8, scoped, tag = 'scoped memory for tpu_custom_call.1']
    #allocation5 [shape = 'u8[4096]{0}', space=vmem, size = 0x1000, scoped, tag = 'output window, operand 0']
    %12 = vsyncpa [#allocation3], 0
    %13 = vsyncpa [#allocation4], 0
    %s14 = scalar_lea.sflag [#allocation4], 1
    %15 = vsyncpa %s14, 0
    loop: start=0, step=1, limit=4
    $region2: #{tpu_custom_call.1} parent=1 // loop_pre_header
      _
    $region3: #{tpu_custom_call.1} parent=1 // loop_header
      %s17 = sphi 0, %s21
      %p18 = scmp.ge.s32.totalorder %s17, 4
      %s27 = sphi 0, %s29
      %s30 = sphi 0, %s27
      %s31 = sphi 0, %s30
      %s47 = sphi 0, %s31
      %s51 = sphi 0, %s51
      %s53 = sphi 0, %s51
      %s54 = sphi 0, %s53
      %s68 = sphi 0, %s54
      %s72 = sphi 0, %s72
      %s74 = sphi 0, %s72
      %s75 = sphi 0, %s74
      %s89 = sphi 0, %s75
      %s93 = sphi 0, %s93
      %s95 = sphi 0, %s93
      %s96 = sphi 0, %s95
      %s110 = sphi 0, %s96
      %s114 = sphi 0, %s114
      %s116 = sphi 0, %s114
      %s117 = sphi 0, %s116
      %s131 = sphi 0, %s117
      %s135 = sphi 0, %s135
      %s137 = sphi 0, %s135
      %s138 = sphi 0, %s137
      %s152 = sphi 0, %s138
      %s156 = sphi 0, %s156
      %s158 = sphi 0, %s156
      %s159 = sphi 0, %s158
      %s173 = sphi 0, %s159
      %s179 = sphi 0, %s181
      %s182 = sphi 0, %s179
      %s183 = sphi 0, %s182
      %s199 = sphi 0, %s183
    $region4: #{tpu_custom_call.1} parent=1 // loop_header_branch
      %20 = sbr.rel (%p18) target = $region8
    $region5: #{tpu_custom_call.1} parent=1 // loop_body
      %s22 = ssub.s32 %s17, 1
      %s23 = ssub.s32 %s17, 2
      %s24 = sadd.s32 %s17, 1
      %s25 = ssub.s32 %s17, %s24
      %p26 = scmp.eq.s32.totalorder %s25, 0
      %s28 = sadd.s32 %s27, 1
      %s29 = scalar_select %p26, %s27, %s28
      %p32 = pneg %p26
      %p33 = scmp.eq.s32.totalorder %s17, 1
      %p34 = por %p32, %p33
      %p35 = scmp.ne.s32.totalorder %s27, %s30
      %p36 = scmp.eq.s32.totalorder %s17, 0
      %p37 = por %p35, %p36
      %p38 = scmp.ne.s32.totalorder %s27, %s30
      %p39 = scmp.eq.s32.totalorder %s22, 1
      %p40 = por %p38, %p39
      %p41 = scmp.ne.s32.totalorder %s30, %s31
      %p42 = scmp.eq.s32.totalorder %s22, 0
      %p43 = por %p41, %p42
      %p44 = scmp.ne.s32.totalorder %s30, %s31
      %p45 = scmp.eq.s32.totalorder %s23, 1
      %p46 = por %p44, %p45
      %p48 = scmp.ne.s32.totalorder %s31, %s47
      %p49 = scmp.eq.s32.totalorder %s23, 0
      %p50 = por %p48, %p49
      %s52 = sadd.s32 %s51, 1
      %p55 = scmp.eq.s32.totalorder %s17, 1
      %p56 = scmp.ne.s32.totalorder %s51, %s53
      %p57 = scmp.eq.s32.totalorder %s17, 0
      %p58 = por %p56, %p57
      %p59 = scmp.ne.s32.totalorder %s51, %s53
      %p60 = scmp.eq.s32.totalorder %s22, 1
      %p61 = por %p59, %p60
      %p62 = scmp.ne.s32.totalorder %s53, %s54
      %p63 = scmp.eq.s32.totalorder %s22, 0
      %p64 = por %p62, %p63
      %p65 = scmp.ne.s32.totalorder %s53, %s54
      %p66 = scmp.eq.s32.totalorder %s23, 1
      %p67 = por %p65, %p66
      %p69 = scmp.ne.s32.totalorder %s54, %s68
      %p70 = scmp.eq.s32.totalorder %s23, 0
      %p71 = por %p69, %p70
      %s73 = sadd.s32 %s72, 1
      %p76 = scmp.eq.s32.totalorder %s17, 1
      %p77 = scmp.ne.s32.totalorder %s72, %s74
      %p78 = scmp.eq.s32.totalorder %s17, 0
      %p79 = por %p77, %p78
      %p80 = scmp.ne.s32.totalorder %s72, %s74
      %p81 = scmp.eq.s32.totalorder %s22, 1
      %p82 = por %p80, %p81
      %p83 = scmp.ne.s32.totalorder %s74, %s75
      %p84 = scmp.eq.s32.totalorder %s22, 0
      %p85 = por %p83, %p84
      %p86 = scmp.ne.s32.totalorder %s74, %s75
      %p87 = scmp.eq.s32.totalorder %s23, 1
      %p88 = por %p86, %p87
      %p90 = scmp.ne.s32.totalorder %s75, %s89
      %p91 = scmp.eq.s32.totalorder %s23, 0
      %p92 = por %p90, %p91
      %s94 = sadd.s32 %s93, 1
      %p97 = scmp.eq.s32.totalorder %s17, 1
      %p98 = scmp.ne.s32.totalorder %s93, %s95
      %p99 = scmp.eq.s32.totalorder %s17, 0
      %p100 = por %p98, %p99
      %p101 = scmp.ne.s32.totalorder %s93, %s95
      %p102 = scmp.eq.s32.totalorder %s22, 1
      %p103 = por %p101, %p102
      %p104 = scmp.ne.s32.totalorder %s95, %s96
      %p105 = scmp.eq.s32.totalorder %s22, 0
      %p106 = por %p104, %p105
      %p107 = scmp.ne.s32.totalorder %s95, %s96
      %p108 = scmp.eq.s32.totalorder %s23, 1
      %p109 = por %p107, %p108
      %p111 = scmp.ne.s32.totalorder %s96, %s110
      %p112 = scmp.eq.s32.totalorder %s23, 0
      %p113 = por %p111, %p112
      %s115 = sadd.s32 %s114, 1
      %p118 = scmp.eq.s32.totalorder %s17, 1
      %p119 = scmp.ne.s32.totalorder %s114, %s116
      %p120 = scmp.eq.s32.totalorder %s17, 0
      %p121 = por %p119, %p120
      %p122 = scmp.ne.s32.totalorder %s114, %s116
      %p123 = scmp.eq.s32.totalorder %s22, 1
      %p124 = por %p122, %p123
      %p125 = scmp.ne.s32.totalorder %s116, %s117
      %p126 = scmp.eq.s32.totalorder %s22, 0
      %p127 = por %p125, %p126
      %p128 = scmp.ne.s32.totalorder %s116, %s117
      %p129 = scmp.eq.s32.totalorder %s23, 1
      %p130 = por %p128, %p129
      %p132 = scmp.ne.s32.totalorder %s117, %s131
      %p133 = scmp.eq.s32.totalorder %s23, 0
      %p134 = por %p132, %p133
      %s136 = sadd.s32 %s135, 1
      %p139 = scmp.eq.s32.totalorder %s17, 1
      %p140 = scmp.ne.s32.totalorder %s135, %s137
      %p141 = scmp.eq.s32.totalorder %s17, 0
      %p142 = por %p140, %p141
      %p143 = scmp.ne.s32.totalorder %s135, %s137
      %p144 = scmp.eq.s32.totalorder %s22, 1
      %p145 = por %p143, %p144
      %p146 = scmp.ne.s32.totalorder %s137, %s138
      %p147 = scmp.eq.s32.totalorder %s22, 0
      %p148 = por %p146, %p147
      %p149 = scmp.ne.s32.totalorder %s137, %s138
      %p150 = scmp.eq.s32.totalorder %s23, 1
      %p151 = por %p149, %p150
      %p153 = scmp.ne.s32.totalorder %s138, %s152
      %p154 = scmp.eq.s32.totalorder %s23, 0
      %p155 = por %p153, %p154
      %s157 = sadd.s32 %s156, 1
      %p160 = scmp.eq.s32.totalorder %s17, 1
      %p161 = scmp.ne.s32.totalorder %s156, %s158
      %p162 = scmp.eq.s32.totalorder %s17, 0
      %p163 = por %p161, %p162
      %p164 = scmp.ne.s32.totalorder %s156, %s158
      %p165 = scmp.eq.s32.totalorder %s22, 1
      %p166 = por %p164, %p165
      %p167 = scmp.ne.s32.totalorder %s158, %s159
      %p168 = scmp.eq.s32.totalorder %s22, 0
      %p169 = por %p167, %p168
      %p170 = scmp.ne.s32.totalorder %s158, %s159
      %p171 = scmp.eq.s32.totalorder %s23, 1
      %p172 = por %p170, %p171
      %p174 = scmp.ne.s32.totalorder %s159, %s173
      %p175 = scmp.eq.s32.totalorder %s23, 0
      %p176 = por %p174, %p175
      %s177 = ssub.s32 %s17, %s24
      %p178 = scmp.eq.s32.totalorder %s177, 0
      %s180 = sadd.s32 %s179, 1
      %s181 = scalar_select %p178, %s179, %s180
      %p184 = pneg %p178
      %p185 = scmp.eq.s32.totalorder %s17, 1
      %p186 = por %p184, %p185
      %p187 = scmp.ne.s32.totalorder %s179, %s182
      %p188 = scmp.eq.s32.totalorder %s17, 0
      %p189 = por %p187, %p188
      %p190 = scmp.ne.s32.totalorder %s179, %s182
      %p191 = scmp.eq.s32.totalorder %s22, 1
      %p192 = por %p190, %p191
      %p193 = scmp.ne.s32.totalorder %s182, %s183
      %p194 = scmp.eq.s32.totalorder %s22, 0
      %p195 = por %p193, %p194
      %p196 = scmp.ne.s32.totalorder %s182, %s183
      %p197 = scmp.eq.s32.totalorder %s23, 1
      %p198 = por %p196, %p197
      %p200 = scmp.ne.s32.totalorder %s183, %s199
      %p201 = scmp.eq.s32.totalorder %s23, 0
      %p202 = por %p200, %p201
      %p203 = scmp.le.s32.totalorder 1, %s17
      %p204 = scmp.lt.s32.totalorder %s17, 3
      %p205 = pnand %p203, %p204
      %p206 = pneg %p205
      // Predicated region
      $region9: #{tpu_custom_call.1} parent=5 // pred_check
        _
      $region10: #{tpu_custom_call.1} parent=5 // pred_check_branch
        %208 = sbr.rel (%p205) target = $region12
      $region11: #{tpu_custom_call.1} parent=5 // pred_region
        %s209 = ssub.s32 %s17, 1
        // Predicated region
        $region13: #{tpu_custom_call.1} parent=11 // pred_check
          %p210 = pneg %p64
        $region14: #{tpu_custom_call.1} parent=11 // pred_check_branch
          %212 = sbr.rel (%p210) target = $region16
        $region15: #{tpu_custom_call.1} parent=11 // pred_region
          _
        $region16: #{tpu_custom_call.1} parent=11 // pred_fallthru
          _
        // Predicated region
        $region17: #{tpu_custom_call.1} parent=11 // pred_check
          %p213 = pneg %p85
        $region18: #{tpu_custom_call.1} parent=11 // pred_check_branch
          %215 = sbr.rel (%p213) target = $region20
        $region19: #{tpu_custom_call.1} parent=11 // pred_region
          _
        $region20: #{tpu_custom_call.1} parent=11 // pred_fallthru
          _
        // Predicated region
        $region21: #{tpu_custom_call.1} parent=11 // pred_check
          %p216 = pneg %p106
        $region22: #{tpu_custom_call.1} parent=11 // pred_check_branch
          %218 = sbr.rel (%p216) target = $region24
        $region23: #{tpu_custom_call.1} parent=11 // pred_region
          _
        $region24: #{tpu_custom_call.1} parent=11 // pred_fallthru
          _
        // Predicated region
        $region25: #{tpu_custom_call.1} parent=11 // pred_check
          %p219 = pneg %p127
        $region26: #{tpu_custom_call.1} parent=11 // pred_check_branch
          %221 = sbr.rel (%p219) target = $region28
        $region27: #{tpu_custom_call.1} parent=11 // pred_region
          %223 = vsyncadd [#allocation3], 0
          %s224 = sshll.u32 %s4, 4
          %s225 = int_to_ptr.hbm [resolvable:$true] %s224
          %s226 = sshll.u32 [#allocation2], 4
          %s227 = int_to_ptr.vmem [resolvable:$true] %s226
          %232 = dma.hbm_to_vmem [thread:$0]  %s225, 9216, %s227, [#allocation3], 64, 64, 4
        $region28: #{tpu_custom_call.1} parent=11 // pred_fallthru
          _
        // Predicated region
        $region29: #{tpu_custom_call.1} parent=11 // pred_check
          %p233 = pneg %p148
        $region30: #{tpu_custom_call.1} parent=11 // pred_check_branch
          %235 = sbr.rel (%p233) target = $region32
        $region31: #{tpu_custom_call.1} parent=11 // pred_region
          _
        $region32: #{tpu_custom_call.1} parent=11 // pred_fallthru
          _
        // Predicated region
        $region33: #{tpu_custom_call.1} parent=11 // pred_check
          %p236 = pneg %p169
        $region34: #{tpu_custom_call.1} parent=11 // pred_check_branch
          %238 = sbr.rel (%p236) target = $region36
        $region35: #{tpu_custom_call.1} parent=11 // pred_region
          _
        $region36: #{tpu_custom_call.1} parent=11 // pred_fallthru
          _
      $region12: #{tpu_custom_call.1} parent=5 // pred_fallthru
        _
      %p239 = scmp.lt.s32.totalorder %s17, 2
      // Predicated region
      $region37: #{tpu_custom_call.1} parent=5 // pred_check
        %p240 = pneg %p239
      $region38: #{tpu_custom_call.1} parent=5 // pred_check_branch
        %242 = sbr.rel (%p240) target = $region40
      $region39: #{tpu_custom_call.1} parent=5 // pred_region
        // Predicated region
        $region41: #{tpu_custom_call.1} parent=39 // pred_check
          %p243 = pneg %p37
        $region42: #{tpu_custom_call.1} parent=39 // pred_check_branch
          %245 = sbr.rel (%p243) target = $region44
        $region43: #{tpu_custom_call.1} parent=39 // pred_region
          %p246 = scmp.lt.s32.totalorder %s17, 1
          %s247 = scalar_select %p246, %s17, 1
          %s248 = smul.addr %s247, 8
          %s249 = smul.addr %s248, 4
          %s250 = scalar_lea.vmem %s0, %s249
        $region44: #{tpu_custom_call.1} parent=39 // pred_fallthru
          _
      $region40: #{tpu_custom_call.1} parent=5 // pred_fallthru
        _
      %p251 = scmp.le.s32.totalorder 1, %s17
      %p252 = scmp.lt.s32.totalorder %s17, 3
      %p253 = pnand %p251, %p252
      %p254 = pneg %p253
      // Predicated region
      $region45: #{tpu_custom_call.1} parent=5 // pred_check
        _
      $region46: #{tpu_custom_call.1} parent=5 // pred_check_branch
        %256 = sbr.rel (%p253) target = $region48
      $region47: #{tpu_custom_call.1} parent=5 // pred_region
        %s257 = ssub.s32 %s17, 1
        // Predicated region
        $region49: #{tpu_custom_call.1} parent=47 // pred_check
          %p258 = pneg %p127
        $region50: #{tpu_custom_call.1} parent=47 // pred_check_branch
          %260 = sbr.rel (%p258) target = $region52
        $region51: #{tpu_custom_call.1} parent=47 // pred_region
          %262 = dma.done [#allocation3], 9216
        $region52: #{tpu_custom_call.1} parent=47 // pred_fallthru
          _
        %p263 = scmp.lt.s32.totalorder %s22, 1
        %s264 = scalar_select %p263, %s22, 1
        %s265 = smul.addr %s264, 8
        %s266 = smul.addr %s265, 4
        %s267 = scalar_lea.vmem %s0, %s266
        %p268 = pneg %p43
        %p269 = pneg %p40
        %p270 = pneg %p64
        %p271 = pneg %p61
        %p272 = pneg %p85
        %p273 = pneg %p82
        %p274 = pneg %p106
        %p275 = pneg %p103
        %p276 = pneg %p127
        %p277 = pneg %p124
        %p278 = pneg %p148
        %p279 = pneg %p145
        %p280 = pneg %p169
        %p281 = pneg %p166
        %p282 = pneg %p195
        %p283 = pneg %p192
        %s284 = sand.u32 %s182, 1
        %s285 = scalar_lea.sflag [#allocation4], %s284
        %s286 = sand.u32 %s182, 1
        %s287 = smul.addr %s286, 4
        %s288 = scalar_lea.vmem [#allocation5], %s287
        %p289 = scmp.lt.s32.totalorder %s22, 1
        %s290 = scalar_select %p289, %s22, 1
        %s291 = smul.addr %s290, 8
        %s292 = smul.addr %s291, 4
        %s293 = scalar_lea.vmem %s0, %s292
        %v295 = vld [vmem:[%s293] sm:$0xf]
        %v296 = vld [vmem:[%s293 + $0x4] sm:$0xf]
        %v297 = vld [vmem:[%s293 + $0x8] sm:$0xf]
        %v298 = vld [vmem:[%s293 + $0xc] sm:$0xf]
        %v299 = vld [vmem:[%s293 + $0x10] sm:$0xf]
        %v300 = vld [vmem:[%s293 + $0x14] sm:$0xf]
        %v301 = vld [vmem:[%s293 + $0x18] sm:$0xf]
        %v302 = vld [vmem:[%s293 + $0x1c] sm:$0xf]
        %v303 = vld [vmem:[%s1] sm:$0xf]
        %v304 = vld [vmem:[%s1 + $0x4] sm:$0xf]
        %v305 = vld [vmem:[%s1 + $0x8] sm:$0xf]
        %v306 = vld [vmem:[%s1 + $0xc] sm:$0xf]
        %v307 = vld [vmem:[%s1 + $0x10] sm:$0xf]
        %v308 = vld [vmem:[%s2] sm:$0x1]
        %v310 = vperm.slane %v308, 0
        %v320 = vunpack.c.l.b16 %v295
        %v321 = vunpack.c.l.b16 %v296
        %v322 = vunpack.c.l.b16 %v297
        %v323 = vunpack.c.l.b16 %v298
        %v324 = vunpack.c.l.b16 %v299
        %v325 = vunpack.c.l.b16 %v300
        %v326 = vunpack.c.l.b16 %v301
        %v327 = vunpack.c.l.b16 %v302
        %v328 = vpack.c.b16 %v321, %v320
        %v329 = vpack.c.b16 %v323, %v322
        %v330 = vpack.c.b16 %v325, %v324
        %v331 = vpack.c.b16 %v327, %v326
        %v337 = vunpack.c.l.b16 %v303
        %v338 = vunpack.c.l.b16 %v304
        %v339 = vunpack.c.l.b16 %v305
        %v340 = vunpack.c.l.b16 %v306
        %v341 = vunpack.c.l.b16 %v307
        %v342 = vpack.c.b16 %v338, %v337
        %v343 = vpack.c.b16 %v340, %v339
        %v344 = vpack.c.b16 %v341, %v341
        %vm347 = vcmask 326656
        %v349 = vsel %vm347, %v328, 0
        %v352 = vsel %vm347, %v329, 0
        %v355 = vsel %vm347, %v330, 0
        %v358 = vsel %vm347, %v331, 0
        %vm360 = vcmask 1043456
        %v362 = vsel %vm360, %v344, 0
        %364 = vmatpush.bf16.msra.mxu0 0
        %365 = vmatpush.bf16.msra.mxu0 0
        %366 = vmatpush.bf16.msra.mxu0 0
        %367 = vmatpush.bf16.msra.mxu0 0
        %368 = vmatpush.bf16.msra.mxu0 0
        %369 = vmatpush.bf16.msra.mxu0 %v362
        %370 = vmatpush.bf16.msra.mxu0 %v343
        %371 = vmatpush.bf16.msra.mxu0 %v342
        %372 = vmatmul.bf16.gmra.mxu0 %v349
        %v373 = vpop.f32.mrf.mxu0
        %v374 = vadd.f32 %v310, %v373
        %v375 = vpop.f32.mrf.mxu0
        %v376 = vadd.f32 %v310, %v375
        %377 = vmatmul.bf16.gmra.mxu0 %v352
        %v378 = vpop.f32.mrf.mxu0
        %v379 = vadd.f32 %v310, %v378
        %v380 = vpop.f32.mrf.mxu0
        %v381 = vadd.f32 %v310, %v380
        %382 = vmatmul.bf16.gmra.mxu0 %v355
        %v383 = vpop.f32.mrf.mxu0
        %v384 = vadd.f32 %v310, %v383
        %v385 = vpop.f32.mrf.mxu0
        %v386 = vadd.f32 %v310, %v385
        %387 = vmatmul.bf16.gmra.mxu0 %v358
        %v388 = vpop.f32.mrf.mxu0
        %v389 = vadd.f32 %v310, %v388
        %v390 = vpop.f32.mrf.mxu0
        %v391 = vadd.f32 %v310, %v390
        %392 = vdwg.mxu0
        %v393 = vmax.f32 %v374, 0.0
        %v394 = vmax.f32 %v376, 0.0
        %v395 = vmax.f32 %v379, 0.0
        %v396 = vmax.f32 %v381, 0.0
        %v397 = vmax.f32 %v384, 0.0
        %v398 = vmax.f32 %v386, 0.0
        %v399 = vmax.f32 %v389, 0.0
        %v400 = vmax.f32 %v391, 0.0
        %v401 = vpack.c.bf16 %v394, %v393
        %v402 = vpack.c.bf16 %v396, %v395
        %v403 = vpack.c.bf16 %v398, %v397
        %v404 = vpack.c.bf16 %v400, %v399
        %v405 = vld [vmem:[%s3] sm:$0xf]
        %v406 = vld [vmem:[%s3 + $0x4] sm:$0xf]
        %v407 = vld [vmem:[%s3 + $0x8] sm:$0xf]
        %v408 = vld [vmem:[%s3 + $0xc] sm:$0xf]
        %v409 = vld [vmem:[%s3 + $0x10] sm:$0xf]
        %v410 = vld [vmem:[%s3 + $0x14] sm:$0xf]
        %v411 = vld [vmem:[%s3 + $0x18] sm:$0xf]
        %v412 = vld [vmem:[%s3 + $0x1c] sm:$0xf]
        %v413 = vld [vmem:[%s3 + $0x20] sm:$0xf]
        %v414 = vld [vmem:[%s3 + $0x24] sm:$0xf]
        %v415 = vld [vmem:[%s3 + $0x28] sm:$0xf]
        %v416 = vld [vmem:[%s3 + $0x2c] sm:$0xf]
        %v417 = vld [vmem:[%s3 + $0x30] sm:$0xf]
        %v418 = vld [vmem:[%s3 + $0x34] sm:$0xf]
        %v419 = vld [vmem:[%s3 + $0x38] sm:$0xf]
        %v420 = vld [vmem:[%s3 + $0x3c] sm:$0xf]
        %v421 = vld [vmem:[%s3 + $0x40] sm:$0xf]
        %v422 = vld [vmem:[%s3 + $0x44] sm:$0xf]
        %v423 = vld [vmem:[%s5] sm:$0x1]
        %v424 = vld [vmem:[%s6] sm:$0xf]
        %v443 = vunpack.c.l.b16 %v405
        %v444 = vunpack.c.l.b16 %v406
        %v445 = vunpack.c.l.b16 %v407
        %v446 = vunpack.c.l.b16 %v408
        %v447 = vunpack.c.l.b16 %v409
        %v448 = vunpack.c.l.b16 %v410
        %v449 = vunpack.c.l.b16 %v411
        %v450 = vunpack.c.l.b16 %v412
        %v451 = vunpack.c.l.b16 %v413
        %v452 = vunpack.c.l.b16 %v414
        %v453 = vunpack.c.l.b16 %v415
        %v454 = vunpack.c.l.b16 %v416
        %v455 = vunpack.c.l.b16 %v417
        %v456 = vunpack.c.l.b16 %v418
        %v457 = vunpack.c.l.b16 %v419
        %v458 = vunpack.c.l.b16 %v420
        %v459 = vunpack.c.l.b16 %v421
        %v460 = vunpack.c.l.b16 %v422
        %v461 = vpack.c.b16 %v444, %v443
        %v462 = vpack.c.b16 %v446, %v445
        %v463 = vpack.c.b16 %v448, %v447
        %v464 = vpack.c.b16 %v450, %v449
        %v465 = vpack.c.b16 %v452, %v451
        %v466 = vpack.c.b16 %v454, %v453
        %v467 = vpack.c.b16 %v456, %v455
        %v468 = vpack.c.b16 %v458, %v457
        %v469 = vpack.c.b16 %v460, %v459
        %vm470 = vcmask 523264
        %v472 = vsel %vm470, %v461, 0
        %v475 = vsel %vm470, %v462, 0
        %v478 = vsel %vm470, %v463, 0
        %v481 = vsel %vm470, %v464, 0
        %v484 = vsel %vm470, %v465, 0
        %v487 = vsel %vm470, %v466, 0
        %v490 = vsel %vm470, %v467, 0
        %v493 = vsel %vm470, %v468, 0
        %v496 = vsel %vm470, %v469, 0
        %498 = vmatpush.bf16.msra.mxu0 0
        %499 = vmatpush.bf16.msra.mxu0 0
        %500 = vmatpush.bf16.msra.mxu0 0
        %501 = vmatpush.bf16.msra.mxu0 0
        %502 = vmatpush.bf16.msra.mxu0 %v404
        %503 = vmatpush.bf16.msra.mxu0 %v403
        %504 = vmatpush.bf16.msra.mxu0 %v402
        %505 = vmatpush.bf16.msra.mxu0 %v401
        %506 = vmatmul.bf16.gmra.mxu0 %v472
        %v507 = vpop.f32.mrf.mxu0
        %v508 = vadd.f32 0.0, %v507
        %v509 = vpop.f32.mrf.mxu0
        %v510 = vadd.f32 0.0, %v509
        %511 = vmatmul.bf16.gmra.mxu0 %v475
        %v512 = vpop.f32.mrf.mxu0
        %v513 = vadd.f32 0.0, %v512
        %v514 = vpop.f32.mrf.mxu0
        %v515 = vadd.f32 0.0, %v514
        %516 = vmatmul.bf16.gmra.mxu0 %v478
        %v517 = vpop.f32.mrf.mxu0
        %v518 = vadd.f32 0.0, %v517
        %v519 = vpop.f32.mrf.mxu0
        %v520 = vadd.f32 0.0, %v519
        %521 = vmatmul.bf16.gmra.mxu0 %v481
        %v522 = vpop.f32.mrf.mxu0
        %v523 = vadd.f32 0.0, %v522
        %v524 = vpop.f32.mrf.mxu0
        %v525 = vadd.f32 0.0, %v524
        %526 = vmatmul.bf16.gmra.mxu0 %v484
        %v527 = vpop.f32.mrf.mxu0
        %v528 = vadd.f32 0.0, %v527
        %v529 = vpop.f32.mrf.mxu0
        %v530 = vadd.f32 0.0, %v529
        %531 = vmatmul.bf16.gmra.mxu0 %v487
        %v532 = vpop.f32.mrf.mxu0
        %v533 = vadd.f32 0.0, %v532
        %v534 = vpop.f32.mrf.mxu0
        %v535 = vadd.f32 0.0, %v534
        %536 = vmatmul.bf16.gmra.mxu0 %v490
        %v537 = vpop.f32.mrf.mxu0
        %v538 = vadd.f32 0.0, %v537
        %v539 = vpop.f32.mrf.mxu0
        %v540 = vadd.f32 0.0, %v539
        %541 = vmatmul.bf16.gmra.mxu0 %v493
        %v542 = vpop.f32.mrf.mxu0
        %v543 = vadd.f32 0.0, %v542
        %v544 = vpop.f32.mrf.mxu0
        %v545 = vadd.f32 0.0, %v544
        %546 = vmatmul.bf16.gmra.mxu0 %v496
        %v547 = vpop.f32.mrf.mxu0
        %v548 = vadd.f32 0.0, %v547
        %v549 = vpop.f32.mrf.mxu0
        %v550 = vadd.f32 0.0, %v549
        %551 = vdwg.mxu0
        %v552 = vpack.c.bf16 %v508, %v508
        %v553 = vpack.c.bf16 %v510, %v510
        %v554 = vpack.c.bf16 %v513, %v513
        %v555 = vpack.c.bf16 %v515, %v515
        %v556 = vpack.c.bf16 %v518, %v518
        %v557 = vpack.c.bf16 %v520, %v520
        %v558 = vpack.c.bf16 %v523, %v523
        %v559 = vpack.c.bf16 %v525, %v525
        %v560 = vpack.c.bf16 %v528, %v528
        %v561 = vpack.c.bf16 %v530, %v530
        %v562 = vpack.c.bf16 %v533, %v533
        %v563 = vpack.c.bf16 %v535, %v535
        %v564 = vpack.c.bf16 %v538, %v538
        %v565 = vpack.c.bf16 %v540, %v540
        %v566 = vpack.c.bf16 %v543, %v543
        %v567 = vpack.c.bf16 %v545, %v545
        %v568 = vpack.c.bf16 %v548, %v548
        %v569 = vpack.c.bf16 %v550, %v550
        %v570 = vld [vmem:[#allocation2] sm:$0xf]
        %v571 = vld [vmem:[#allocation2 + $0x4] sm:$0xf]
        %v572 = vld [vmem:[#allocation2 + $0x8] sm:$0xf]
        %v573 = vld [vmem:[#allocation2 + $0xc] sm:$0xf]
        %v574 = vld [vmem:[#allocation2 + $0x10] sm:$0xf]
        %v575 = vld [vmem:[#allocation2 + $0x14] sm:$0xf]
        %v576 = vld [vmem:[#allocation2 + $0x18] sm:$0xf]
        %v577 = vld [vmem:[#allocation2 + $0x1c] sm:$0xf]
        %v578 = vld [vmem:[#allocation2 + $0x20] sm:$0xf]
        %v579 = vld [vmem:[#allocation2 + $0x24] sm:$0xf]
        %v580 = vld [vmem:[#allocation2 + $0x28] sm:$0xf]
        %v581 = vld [vmem:[#allocation2 + $0x2c] sm:$0xf]
        %v582 = vld [vmem:[#allocation2 + $0x30] sm:$0xf]
        %v583 = vld [vmem:[#allocation2 + $0x34] sm:$0xf]
        %v584 = vld [vmem:[#allocation2 + $0x38] sm:$0xf]
        %v585 = vld [vmem:[#allocation2 + $0x3c] sm:$0xf]
        %s586 = scalar_lea.vmem [#allocation2], 64
        %v587 = vld [vmem:[%s586] sm:$0xf]
        %v588 = vld [vmem:[%s586 + $0x4] sm:$0xf]
        %v589 = vld [vmem:[%s586 + $0x8] sm:$0xf]
        %v590 = vld [vmem:[%s586 + $0xc] sm:$0xf]
        %v591 = vld [vmem:[%s586 + $0x10] sm:$0xf]
        %v592 = vld [vmem:[%s586 + $0x14] sm:$0xf]
        %v593 = vld [vmem:[%s586 + $0x18] sm:$0xf]
        %v594 = vld [vmem:[%s586 + $0x1c] sm:$0xf]
        %v595 = vld [vmem:[%s586 + $0x20] sm:$0xf]
        %v596 = vld [vmem:[%s586 + $0x24] sm:$0xf]
        %v597 = vld [vmem:[%s586 + $0x28] sm:$0xf]
        %v598 = vld [vmem:[%s586 + $0x2c] sm:$0xf]
        %v599 = vld [vmem:[%s586 + $0x30] sm:$0xf]
        %v600 = vld [vmem:[%s586 + $0x34] sm:$0xf]
        %v601 = vld [vmem:[%s586 + $0x38] sm:$0xf]
        %v602 = vld [vmem:[%s586 + $0x3c] sm:$0xf]
        %v605 = vunpack.c.l.b16 %v554
        %v606 = vunpack.c.l.b16 %v555
        %v607 = vpack.c.b16 %v606, %v605
        %v625 = vunpack.c.l.b16 %v587
        %v626 = vunpack.c.l.b16 %v588
        %v627 = vunpack.c.l.b16 %v589
        %v628 = vunpack.c.l.b16 %v590
        %v629 = vunpack.c.l.b16 %v591
        %v630 = vunpack.c.l.b16 %v592
        %v631 = vunpack.c.l.b16 %v593
        %v632 = vunpack.c.l.b16 %v594
        %v633 = vunpack.c.l.b16 %v595
        %v634 = vunpack.c.l.b16 %v596
        %v635 = vunpack.c.l.b16 %v597
        %v636 = vunpack.c.l.b16 %v598
        %v637 = vunpack.c.l.b16 %v599
        %v638 = vunpack.c.l.b16 %v600
        %v639 = vunpack.c.l.b16 %v601
        %v640 = vunpack.c.l.b16 %v602
        %v641 = vpack.c.b16 %v626, %v625
        %v642 = vpack.c.b16 %v628, %v627
        %v643 = vpack.c.b16 %v630, %v629
        %v644 = vpack.c.b16 %v632, %v631
        %v645 = vpack.c.b16 %v634, %v633
        %v646 = vpack.c.b16 %v636, %v635
        %v647 = vpack.c.b16 %v638, %v637
        %v648 = vpack.c.b16 %v640, %v639
        %657 = vmatpush.bf16.msra.mxu0 %v648
        %658 = vmatpush.bf16.msra.mxu0 %v647
        %659 = vmatpush.bf16.msra.mxu0 %v646
        %660 = vmatpush.bf16.msra.mxu0 %v645
        %661 = vmatpush.bf16.msra.mxu0 %v644
        %662 = vmatpush.bf16.msra.mxu0 %v643
        %663 = vmatpush.bf16.msra.mxu0 %v642
        %664 = vmatpush.bf16.msra.mxu0 %v641
        %665 = vmatmul.bf16.gmra.mxu0 %v607
        %v666 = vpop.f32.mrf.mxu0
        %v667 = vadd.f32 0.0, %v666
        %v668 = vpop.f32.mrf.mxu0
        %v669 = vadd.f32 0.0, %v668
        %670 = vdwg.mxu0
        %v673 = vunpack.c.l.b16 %v552
        %v674 = vunpack.c.l.b16 %v553
        %v675 = vpack.c.b16 %v674, %v673
        %v693 = vunpack.c.l.b16 %v570
        %v694 = vunpack.c.l.b16 %v571
        %v695 = vunpack.c.l.b16 %v572
        %v696 = vunpack.c.l.b16 %v573
        %v697 = vunpack.c.l.b16 %v574
        %v698 = vunpack.c.l.b16 %v575
        %v699 = vunpack.c.l.b16 %v576
        %v700 = vunpack.c.l.b16 %v577
        %v701 = vunpack.c.l.b16 %v578
        %v702 = vunpack.c.l.b16 %v579
        %v703 = vunpack.c.l.b16 %v580
        %v704 = vunpack.c.l.b16 %v581
        %v705 = vunpack.c.l.b16 %v582
        %v706 = vunpack.c.l.b16 %v583
        %v707 = vunpack.c.l.b16 %v584
        %v708 = vunpack.c.l.b16 %v585
        %v709 = vpack.c.b16 %v694, %v693
        %v710 = vpack.c.b16 %v696, %v695
        %v711 = vpack.c.b16 %v698, %v697
        %v712 = vpack.c.b16 %v700, %v699
        %v713 = vpack.c.b16 %v702, %v701
        %v714 = vpack.c.b16 %v704, %v703
        %v715 = vpack.c.b16 %v706, %v705
        %v716 = vpack.c.b16 %v708, %v707
        %725 = vmatpush.bf16.msra.mxu0 %v716
        %726 = vmatpush.bf16.msra.mxu0 %v715
        %727 = vmatpush.bf16.msra.mxu0 %v714
        %728 = vmatpush.bf16.msra.mxu0 %v713
        %729 = vmatpush.bf16.msra.mxu0 %v712
        %730 = vmatpush.bf16.msra.mxu0 %v711
        %731 = vmatpush.bf16.msra.mxu0 %v710
        %732 = vmatpush.bf16.msra.mxu0 %v709
        %733 = vmatmul.bf16.gmra.mxu0 %v675
        %v734 = vpop.f32.mrf.mxu0
        %v735 = vadd.f32 %v667, %v734
        %v736 = vpop.f32.mrf.mxu0
        %v737 = vadd.f32 %v669, %v736
        %738 = vdwg.mxu0
        %s739 = scalar_lea.vmem [#allocation2], 128
        %v740 = vld [vmem:[%s739] sm:$0xf]
        %v741 = vld [vmem:[%s739 + $0x4] sm:$0xf]
        %v742 = vld [vmem:[%s739 + $0x8] sm:$0xf]
        %v743 = vld [vmem:[%s739 + $0xc] sm:$0xf]
        %v744 = vld [vmem:[%s739 + $0x10] sm:$0xf]
        %v745 = vld [vmem:[%s739 + $0x14] sm:$0xf]
        %v746 = vld [vmem:[%s739 + $0x18] sm:$0xf]
        %v747 = vld [vmem:[%s739 + $0x1c] sm:$0xf]
        %v748 = vld [vmem:[%s739 + $0x20] sm:$0xf]
        %v749 = vld [vmem:[%s739 + $0x24] sm:$0xf]
        %v750 = vld [vmem:[%s739 + $0x28] sm:$0xf]
        %v751 = vld [vmem:[%s739 + $0x2c] sm:$0xf]
        %v752 = vld [vmem:[%s739 + $0x30] sm:$0xf]
        %v753 = vld [vmem:[%s739 + $0x34] sm:$0xf]
        %v754 = vld [vmem:[%s739 + $0x38] sm:$0xf]
        %v755 = vld [vmem:[%s739 + $0x3c] sm:$0xf]
        %v758 = vunpack.c.l.b16 %v556
        %v759 = vunpack.c.l.b16 %v557
        %v760 = vpack.c.b16 %v759, %v758
        %v778 = vunpack.c.l.b16 %v740
        %v779 = vunpack.c.l.b16 %v741
        %v780 = vunpack.c.l.b16 %v742
        %v781 = vunpack.c.l.b16 %v743
        %v782 = vunpack.c.l.b16 %v744
        %v783 = vunpack.c.l.b16 %v745
        %v784 = vunpack.c.l.b16 %v746
        %v785 = vunpack.c.l.b16 %v747
        %v786 = vunpack.c.l.b16 %v748
        %v787 = vunpack.c.l.b16 %v749
        %v788 = vunpack.c.l.b16 %v750
        %v789 = vunpack.c.l.b16 %v751
        %v790 = vunpack.c.l.b16 %v752
        %v791 = vunpack.c.l.b16 %v753
        %v792 = vunpack.c.l.b16 %v754
        %v793 = vunpack.c.l.b16 %v755
        %v794 = vpack.c.b16 %v779, %v778
        %v795 = vpack.c.b16 %v781, %v780
        %v796 = vpack.c.b16 %v783, %v782
        %v797 = vpack.c.b16 %v785, %v784
        %v798 = vpack.c.b16 %v787, %v786
        %v799 = vpack.c.b16 %v789, %v788
        %v800 = vpack.c.b16 %v791, %v790
        %v801 = vpack.c.b16 %v793, %v792
        %810 = vmatpush.bf16.msra.mxu0 %v801
        %811 = vmatpush.bf16.msra.mxu0 %v800
        %812 = vmatpush.bf16.msra.mxu0 %v799
        %813 = vmatpush.bf16.msra.mxu0 %v798
        %814 = vmatpush.bf16.msra.mxu0 %v797
        %815 = vmatpush.bf16.msra.mxu0 %v796
        %816 = vmatpush.bf16.msra.mxu0 %v795
        %817 = vmatpush.bf16.msra.mxu0 %v794
        %818 = vmatmul.bf16.gmra.mxu0 %v760
        %v819 = vpop.f32.mrf.mxu0
        %v820 = vadd.f32 0.0, %v819
        %v821 = vpop.f32.mrf.mxu0
        %v822 = vadd.f32 0.0, %v821
        %823 = vdwg.mxu0
        %v824 = vadd.f32 %v735, %v820
        %v825 = vadd.f32 %v737, %v822
        %s826 = scalar_lea.vmem [#allocation2], 192
        %v827 = vld [vmem:[%s826] sm:$0xf]
        %v828 = vld [vmem:[%s826 + $0x4] sm:$0xf]
        %v829 = vld [vmem:[%s826 + $0x8] sm:$0xf]
        %v830 = vld [vmem:[%s826 + $0xc] sm:$0xf]
        %v831 = vld [vmem:[%s826 + $0x10] sm:$0xf]
        %v832 = vld [vmem:[%s826 + $0x14] sm:$0xf]
        %v833 = vld [vmem:[%s826 + $0x18] sm:$0xf]
        %v834 = vld [vmem:[%s826 + $0x1c] sm:$0xf]
        %v835 = vld [vmem:[%s826 + $0x20] sm:$0xf]
        %v836 = vld [vmem:[%s826 + $0x24] sm:$0xf]
        %v837 = vld [vmem:[%s826 + $0x28] sm:$0xf]
        %v838 = vld [vmem:[%s826 + $0x2c] sm:$0xf]
        %v839 = vld [vmem:[%s826 + $0x30] sm:$0xf]
        %v840 = vld [vmem:[%s826 + $0x34] sm:$0xf]
        %v841 = vld [vmem:[%s826 + $0x38] sm:$0xf]
        %v842 = vld [vmem:[%s826 + $0x3c] sm:$0xf]
        %v845 = vunpack.c.l.b16 %v558
        %v846 = vunpack.c.l.b16 %v559
        %v847 = vpack.c.b16 %v846, %v845
        %v865 = vunpack.c.l.b16 %v827
        %v866 = vunpack.c.l.b16 %v828
        %v867 = vunpack.c.l.b16 %v829
        %v868 = vunpack.c.l.b16 %v830
        %v869 = vunpack.c.l.b16 %v831
        %v870 = vunpack.c.l.b16 %v832
        %v871 = vunpack.c.l.b16 %v833
        %v872 = vunpack.c.l.b16 %v834
        %v873 = vunpack.c.l.b16 %v835
        %v874 = vunpack.c.l.b16 %v836
        %v875 = vunpack.c.l.b16 %v837
        %v876 = vunpack.c.l.b16 %v838
        %v877 = vunpack.c.l.b16 %v839
        %v878 = vunpack.c.l.b16 %v840
        %v879 = vunpack.c.l.b16 %v841
        %v880 = vunpack.c.l.b16 %v842
        %v881 = vpack.c.b16 %v866, %v865
        %v882 = vpack.c.b16 %v868, %v867
        %v883 = vpack.c.b16 %v870, %v869
        %v884 = vpack.c.b16 %v872, %v871
        %v885 = vpack.c.b16 %v874, %v873
        %v886 = vpack.c.b16 %v876, %v875
        %v887 = vpack.c.b16 %v878, %v877
        %v888 = vpack.c.b16 %v880, %v879
        %897 = vmatpush.bf16.msra.mxu0 %v888
        %898 = vmatpush.bf16.msra.mxu0 %v887
        %899 = vmatpush.bf16.msra.mxu0 %v886
        %900 = vmatpush.bf16.msra.mxu0 %v885
        %901 = vmatpush.bf16.msra.mxu0 %v884
        %902 = vmatpush.bf16.msra.mxu0 %v883
        %903 = vmatpush.bf16.msra.mxu0 %v882
        %904 = vmatpush.bf16.msra.mxu0 %v881
        %905 = vmatmul.bf16.gmra.mxu0 %v847
        %v906 = vpop.f32.mrf.mxu0
        %v907 = vadd.f32 0.0, %v906
        %v908 = vpop.f32.mrf.mxu0
        %v909 = vadd.f32 0.0, %v908
        %910 = vdwg.mxu0
        %v911 = vadd.f32 %v824, %v907
        %v912 = vadd.f32 %v825, %v909
        %s913 = scalar_lea.vmem [#allocation2], 256
        %v914 = vld [vmem:[%s913] sm:$0xf]
        %v915 = vld [vmem:[%s913 + $0x4] sm:$0xf]
        %v916 = vld [vmem:[%s913 + $0x8] sm:$0xf]
        %v917 = vld [vmem:[%s913 + $0xc] sm:$0xf]
        %v918 = vld [vmem:[%s913 + $0x10] sm:$0xf]
        %v919 = vld [vmem:[%s913 + $0x14] sm:$0xf]
        %v920 = vld [vmem:[%s913 + $0x18] sm:$0xf]
        %v921 = vld [vmem:[%s913 + $0x1c] sm:$0xf]
        %v922 = vld [vmem:[%s913 + $0x20] sm:$0xf]
        %v923 = vld [vmem:[%s913 + $0x24] sm:$0xf]
        %v924 = vld [vmem:[%s913 + $0x28] sm:$0xf]
        %v925 = vld [vmem:[%s913 + $0x2c] sm:$0xf]
        %v926 = vld [vmem:[%s913 + $0x30] sm:$0xf]
        %v927 = vld [vmem:[%s913 + $0x34] sm:$0xf]
        %v928 = vld [vmem:[%s913 + $0x38] sm:$0xf]
        %v929 = vld [vmem:[%s913 + $0x3c] sm:$0xf]
        %v932 = vunpack.c.l.b16 %v560
        %v933 = vunpack.c.l.b16 %v561
        %v934 = vpack.c.b16 %v933, %v932
        %v952 = vunpack.c.l.b16 %v914
        %v953 = vunpack.c.l.b16 %v915
        %v954 = vunpack.c.l.b16 %v916
        %v955 = vunpack.c.l.b16 %v917
        %v956 = vunpack.c.l.b16 %v918
        %v957 = vunpack.c.l.b16 %v919
        %v958 = vunpack.c.l.b16 %v920
        %v959 = vunpack.c.l.b16 %v921
        %v960 = vunpack.c.l.b16 %v922
        %v961 = vunpack.c.l.b16 %v923
        %v962 = vunpack.c.l.b16 %v924
        %v963 = vunpack.c.l.b16 %v925
        %v964 = vunpack.c.l.b16 %v926
        %v965 = vunpack.c.l.b16 %v927
        %v966 = vunpack.c.l.b16 %v928
        %v967 = vunpack.c.l.b16 %v929
        %v968 = vpack.c.b16 %v953, %v952
        %v969 = vpack.c.b16 %v955, %v954
        %v970 = vpack.c.b16 %v957, %v956
        %v971 = vpack.c.b16 %v959, %v958
        %v972 = vpack.c.b16 %v961, %v960
        %v973 = vpack.c.b16 %v963, %v962
        %v974 = vpack.c.b16 %v965, %v964
        %v975 = vpack.c.b16 %v967, %v966
        %984 = vmatpush.bf16.msra.mxu0 %v975
        %985 = vmatpush.bf16.msra.mxu0 %v974
        %986 = vmatpush.bf16.msra.mxu0 %v973
        %987 = vmatpush.bf16.msra.mxu0 %v972
        %988 = vmatpush.bf16.msra.mxu0 %v971
        %989 = vmatpush.bf16.msra.mxu0 %v970
        %990 = vmatpush.bf16.msra.mxu0 %v969
        %991 = vmatpush.bf16.msra.mxu0 %v968
        %992 = vmatmul.bf16.gmra.mxu0 %v934
        %v993 = vpop.f32.mrf.mxu0
        %v994 = vadd.f32 0.0, %v993
        %v995 = vpop.f32.mrf.mxu0
        %v996 = vadd.f32 0.0, %v995
        %997 = vdwg.mxu0
        %v998 = vadd.f32 %v911, %v994
        %v999 = vadd.f32 %v912, %v996
        %s1000 = scalar_lea.vmem [#allocation2], 320
        %v1001 = vld [vmem:[%s1000] sm:$0xf]
        %v1002 = vld [vmem:[%s1000 + $0x4] sm:$0xf]
        %v1003 = vld [vmem:[%s1000 + $0x8] sm:$0xf]
        %v1004 = vld [vmem:[%s1000 + $0xc] sm:$0xf]
        %v1005 = vld [vmem:[%s1000 + $0x10] sm:$0xf]
        %v1006 = vld [vmem:[%s1000 + $0x14] sm:$0xf]
        %v1007 = vld [vmem:[%s1000 + $0x18] sm:$0xf]
        %v1008 = vld [vmem:[%s1000 + $0x1c] sm:$0xf]
        %v1009 = vld [vmem:[%s1000 + $0x20] sm:$0xf]
        %v1010 = vld [vmem:[%s1000 + $0x24] sm:$0xf]
        %v1011 = vld [vmem:[%s1000 + $0x28] sm:$0xf]
        %v1012 = vld [vmem:[%s1000 + $0x2c] sm:$0xf]
        %v1013 = vld [vmem:[%s1000 + $0x30] sm:$0xf]
        %v1014 = vld [vmem:[%s1000 + $0x34] sm:$0xf]
        %v1015 = vld [vmem:[%s1000 + $0x38] sm:$0xf]
        %v1016 = vld [vmem:[%s1000 + $0x3c] sm:$0xf]
        %v1019 = vunpack.c.l.b16 %v562
        %v1020 = vunpack.c.l.b16 %v563
        %v1021 = vpack.c.b16 %v1020, %v1019
        %v1039 = vunpack.c.l.b16 %v1001
        %v1040 = vunpack.c.l.b16 %v1002
        %v1041 = vunpack.c.l.b16 %v1003
        %v1042 = vunpack.c.l.b16 %v1004
        %v1043 = vunpack.c.l.b16 %v1005
        %v1044 = vunpack.c.l.b16 %v1006
        %v1045 = vunpack.c.l.b16 %v1007
        %v1046 = vunpack.c.l.b16 %v1008
        %v1047 = vunpack.c.l.b16 %v1009
        %v1048 = vunpack.c.l.b16 %v1010
        %v1049 = vunpack.c.l.b16 %v1011
        %v1050 = vunpack.c.l.b16 %v1012
        %v1051 = vunpack.c.l.b16 %v1013
        %v1052 = vunpack.c.l.b16 %v1014
        %v1053 = vunpack.c.l.b16 %v1015
        %v1054 = vunpack.c.l.b16 %v1016
        %v1055 = vpack.c.b16 %v1040, %v1039
        %v1056 = vpack.c.b16 %v1042, %v1041
        %v1057 = vpack.c.b16 %v1044, %v1043
        %v1058 = vpack.c.b16 %v1046, %v1045
        %v1059 = vpack.c.b16 %v1048, %v1047
        %v1060 = vpack.c.b16 %v1050, %v1049
        %v1061 = vpack.c.b16 %v1052, %v1051
        %v1062 = vpack.c.b16 %v1054, %v1053
        %1071 = vmatpush.bf16.msra.mxu0 %v1062
        %1072 = vmatpush.bf16.msra.mxu0 %v1061
        %1073 = vmatpush.bf16.msra.mxu0 %v1060
        %1074 = vmatpush.bf16.msra.mxu0 %v1059
        %1075 = vmatpush.bf16.msra.mxu0 %v1058
        %1076 = vmatpush.bf16.msra.mxu0 %v1057
        %1077 = vmatpush.bf16.msra.mxu0 %v1056
        %1078 = vmatpush.bf16.msra.mxu0 %v1055
        %1079 = vmatmul.bf16.gmra.mxu0 %v1021
        %v1080 = vpop.f32.mrf.mxu0
        %v1081 = vadd.f32 0.0, %v1080
        %v1082 = vpop.f32.mrf.mxu0
        %v1083 = vadd.f32 0.0, %v1082
        %1084 = vdwg.mxu0
        %v1085 = vadd.f32 %v998, %v1081
        %v1086 = vadd.f32 %v999, %v1083
        %s1087 = scalar_lea.vmem [#allocation2], 384
        %v1088 = vld [vmem:[%s1087] sm:$0xf]
        %v1089 = vld [vmem:[%s1087 + $0x4] sm:$0xf]
        %v1090 = vld [vmem:[%s1087 + $0x8] sm:$0xf]
        %v1091 = vld [vmem:[%s1087 + $0xc] sm:$0xf]
        %v1092 = vld [vmem:[%s1087 + $0x10] sm:$0xf]
        %v1093 = vld [vmem:[%s1087 + $0x14] sm:$0xf]
        %v1094 = vld [vmem:[%s1087 + $0x18] sm:$0xf]
        %v1095 = vld [vmem:[%s1087 + $0x1c] sm:$0xf]
        %v1096 = vld [vmem:[%s1087 + $0x20] sm:$0xf]
        %v1097 = vld [vmem:[%s1087 + $0x24] sm:$0xf]
        %v1098 = vld [vmem:[%s1087 + $0x28] sm:$0xf]
        %v1099 = vld [vmem:[%s1087 + $0x2c] sm:$0xf]
        %v1100 = vld [vmem:[%s1087 + $0x30] sm:$0xf]
        %v1101 = vld [vmem:[%s1087 + $0x34] sm:$0xf]
        %v1102 = vld [vmem:[%s1087 + $0x38] sm:$0xf]
        %v1103 = vld [vmem:[%s1087 + $0x3c] sm:$0xf]
        %v1106 = vunpack.c.l.b16 %v564
        %v1107 = vunpack.c.l.b16 %v565
        %v1108 = vpack.c.b16 %v1107, %v1106
        %v1126 = vunpack.c.l.b16 %v1088
        %v1127 = vunpack.c.l.b16 %v1089
        %v1128 = vunpack.c.l.b16 %v1090
        %v1129 = vunpack.c.l.b16 %v1091
        %v1130 = vunpack.c.l.b16 %v1092
        %v1131 = vunpack.c.l.b16 %v1093
        %v1132 = vunpack.c.l.b16 %v1094
        %v1133 = vunpack.c.l.b16 %v1095
        %v1134 = vunpack.c.l.b16 %v1096
        %v1135 = vunpack.c.l.b16 %v1097
        %v1136 = vunpack.c.l.b16 %v1098
        %v1137 = vunpack.c.l.b16 %v1099
        %v1138 = vunpack.c.l.b16 %v1100
        %v1139 = vunpack.c.l.b16 %v1101
        %v1140 = vunpack.c.l.b16 %v1102
        %v1141 = vunpack.c.l.b16 %v1103
        %v1142 = vpack.c.b16 %v1127, %v1126
        %v1143 = vpack.c.b16 %v1129, %v1128
        %v1144 = vpack.c.b16 %v1131, %v1130
        %v1145 = vpack.c.b16 %v1133, %v1132
        %v1146 = vpack.c.b16 %v1135, %v1134
        %v1147 = vpack.c.b16 %v1137, %v1136
        %v1148 = vpack.c.b16 %v1139, %v1138
        %v1149 = vpack.c.b16 %v1141, %v1140
        %1158 = vmatpush.bf16.msra.mxu0 %v1149
        %1159 = vmatpush.bf16.msra.mxu0 %v1148
        %1160 = vmatpush.bf16.msra.mxu0 %v1147
        %1161 = vmatpush.bf16.msra.mxu0 %v1146
        %1162 = vmatpush.bf16.msra.mxu0 %v1145
        %1163 = vmatpush.bf16.msra.mxu0 %v1144
        %1164 = vmatpush.bf16.msra.mxu0 %v1143
        %1165 = vmatpush.bf16.msra.mxu0 %v1142
        %1166 = vmatmul.bf16.gmra.mxu0 %v1108
        %v1167 = vpop.f32.mrf.mxu0
        %v1168 = vadd.f32 0.0, %v1167
        %v1169 = vpop.f32.mrf.mxu0
        %v1170 = vadd.f32 0.0, %v1169
        %1171 = vdwg.mxu0
        %v1172 = vadd.f32 %v1085, %v1168
        %v1173 = vadd.f32 %v1086, %v1170
        %s1174 = scalar_lea.vmem [#allocation2], 448
        %v1175 = vld [vmem:[%s1174] sm:$0xf]
        %v1176 = vld [vmem:[%s1174 + $0x4] sm:$0xf]
        %v1177 = vld [vmem:[%s1174 + $0x8] sm:$0xf]
        %v1178 = vld [vmem:[%s1174 + $0xc] sm:$0xf]
        %v1179 = vld [vmem:[%s1174 + $0x10] sm:$0xf]
        %v1180 = vld [vmem:[%s1174 + $0x14] sm:$0xf]
        %v1181 = vld [vmem:[%s1174 + $0x18] sm:$0xf]
        %v1182 = vld [vmem:[%s1174 + $0x1c] sm:$0xf]
        %v1183 = vld [vmem:[%s1174 + $0x20] sm:$0xf]
        %v1184 = vld [vmem:[%s1174 + $0x24] sm:$0xf]
        %v1185 = vld [vmem:[%s1174 + $0x28] sm:$0xf]
        %v1186 = vld [vmem:[%s1174 + $0x2c] sm:$0xf]
        %v1187 = vld [vmem:[%s1174 + $0x30] sm:$0xf]
        %v1188 = vld [vmem:[%s1174 + $0x34] sm:$0xf]
        %v1189 = vld [vmem:[%s1174 + $0x38] sm:$0xf]
        %v1190 = vld [vmem:[%s1174 + $0x3c] sm:$0xf]
        %v1193 = vunpack.c.l.b16 %v566
        %v1194 = vunpack.c.l.b16 %v567
        %v1195 = vpack.c.b16 %v1194, %v1193
        %v1213 = vunpack.c.l.b16 %v1175
        %v1214 = vunpack.c.l.b16 %v1176
        %v1215 = vunpack.c.l.b16 %v1177
        %v1216 = vunpack.c.l.b16 %v1178
        %v1217 = vunpack.c.l.b16 %v1179
        %v1218 = vunpack.c.l.b16 %v1180
        %v1219 = vunpack.c.l.b16 %v1181
        %v1220 = vunpack.c.l.b16 %v1182
        %v1221 = vunpack.c.l.b16 %v1183
        %v1222 = vunpack.c.l.b16 %v1184
        %v1223 = vunpack.c.l.b16 %v1185
        %v1224 = vunpack.c.l.b16 %v1186
        %v1225 = vunpack.c.l.b16 %v1187
        %v1226 = vunpack.c.l.b16 %v1188
        %v1227 = vunpack.c.l.b16 %v1189
        %v1228 = vunpack.c.l.b16 %v1190
        %v1229 = vpack.c.b16 %v1214, %v1213
        %v1230 = vpack.c.b16 %v1216, %v1215
        %v1231 = vpack.c.b16 %v1218, %v1217
        %v1232 = vpack.c.b16 %v1220, %v1219
        %v1233 = vpack.c.b16 %v1222, %v1221
        %v1234 = vpack.c.b16 %v1224, %v1223
        %v1235 = vpack.c.b16 %v1226, %v1225
        %v1236 = vpack.c.b16 %v1228, %v1227
        %1245 = vmatpush.bf16.msra.mxu0 %v1236
        %1246 = vmatpush.bf16.msra.mxu0 %v1235
        %1247 = vmatpush.bf16.msra.mxu0 %v1234
        %1248 = vmatpush.bf16.msra.mxu0 %v1233
        %1249 = vmatpush.bf16.msra.mxu0 %v1232
        %1250 = vmatpush.bf16.msra.mxu0 %v1231
        %1251 = vmatpush.bf16.msra.mxu0 %v1230
        %1252 = vmatpush.bf16.msra.mxu0 %v1229
        %1253 = vmatmul.bf16.gmra.mxu0 %v1195
        %v1254 = vpop.f32.mrf.mxu0
        %v1255 = vadd.f32 0.0, %v1254
        %v1256 = vpop.f32.mrf.mxu0
        %v1257 = vadd.f32 0.0, %v1256
        %1258 = vdwg.mxu0
        %v1259 = vadd.f32 %v1172, %v1255
        %v1260 = vadd.f32 %v1173, %v1257
        %s1261 = scalar_lea.vmem [#allocation2], 512
        %v1262 = vld [vmem:[%s1261] sm:$0xf]
        %v1263 = vld [vmem:[%s1261 + $0x4] sm:$0xf]
        %v1264 = vld [vmem:[%s1261 + $0x8] sm:$0xf]
        %v1265 = vld [vmem:[%s1261 + $0xc] sm:$0xf]
        %v1266 = vld [vmem:[%s1261 + $0x10] sm:$0xf]
        %v1267 = vld [vmem:[%s1261 + $0x14] sm:$0xf]
        %v1268 = vld [vmem:[%s1261 + $0x18] sm:$0xf]
        %v1269 = vld [vmem:[%s1261 + $0x1c] sm:$0xf]
        %v1270 = vld [vmem:[%s1261 + $0x20] sm:$0xf]
        %v1271 = vld [vmem:[%s1261 + $0x24] sm:$0xf]
        %v1272 = vld [vmem:[%s1261 + $0x28] sm:$0xf]
        %v1273 = vld [vmem:[%s1261 + $0x2c] sm:$0xf]
        %v1274 = vld [vmem:[%s1261 + $0x30] sm:$0xf]
        %v1275 = vld [vmem:[%s1261 + $0x34] sm:$0xf]
        %v1276 = vld [vmem:[%s1261 + $0x38] sm:$0xf]
        %v1277 = vld [vmem:[%s1261 + $0x3c] sm:$0xf]
        %v1280 = vunpack.c.l.b16 %v568
        %v1281 = vunpack.c.l.b16 %v569
        %v1282 = vpack.c.b16 %v1281, %v1280
        %v1300 = vunpack.c.l.b16 %v1262
        %v1301 = vunpack.c.l.b16 %v1263
        %v1302 = vunpack.c.l.b16 %v1264
        %v1303 = vunpack.c.l.b16 %v1265
        %v1304 = vunpack.c.l.b16 %v1266
        %v1305 = vunpack.c.l.b16 %v1267
        %v1306 = vunpack.c.l.b16 %v1268
        %v1307 = vunpack.c.l.b16 %v1269
        %v1308 = vunpack.c.l.b16 %v1270
        %v1309 = vunpack.c.l.b16 %v1271
        %v1310 = vunpack.c.l.b16 %v1272
        %v1311 = vunpack.c.l.b16 %v1273
        %v1312 = vunpack.c.l.b16 %v1274
        %v1313 = vunpack.c.l.b16 %v1275
        %v1314 = vunpack.c.l.b16 %v1276
        %v1315 = vunpack.c.l.b16 %v1277
        %v1316 = vpack.c.b16 %v1301, %v1300
        %v1317 = vpack.c.b16 %v1303, %v1302
        %v1318 = vpack.c.b16 %v1305, %v1304
        %v1319 = vpack.c.b16 %v1307, %v1306
        %v1320 = vpack.c.b16 %v1309, %v1308
        %v1321 = vpack.c.b16 %v1311, %v1310
        %v1322 = vpack.c.b16 %v1313, %v1312
        %v1323 = vpack.c.b16 %v1315, %v1314
        %1332 = vmatpush.bf16.msra.mxu0 %v1323
        %1333 = vmatpush.bf16.msra.mxu0 %v1322
        %1334 = vmatpush.bf16.msra.mxu0 %v1321
        %1335 = vmatpush.bf16.msra.mxu0 %v1320
        %1336 = vmatpush.bf16.msra.mxu0 %v1319
        %1337 = vmatpush.bf16.msra.mxu0 %v1318
        %1338 = vmatpush.bf16.msra.mxu0 %v1317
        %1339 = vmatpush.bf16.msra.mxu0 %v1316
        %1340 = vmatmul.bf16.gmra.mxu0 %v1282
        %v1341 = vpop.f32.mrf.mxu0
        %v1342 = vadd.f32 0.0, %v1341
        %v1343 = vpop.f32.mrf.mxu0
        %v1344 = vadd.f32 0.0, %v1343
        %1345 = vdwg.mxu0
        %v1346 = vadd.f32 %v1259, %v1342
        %v1347 = vadd.f32 %v1260, %v1344
        %v1349 = vperm.slane %v423, 0
        %v1351 = vadd.f32 %v1346, %v1349
        %v1352 = vadd.f32 %v1347, %v1349
        %v1353 = vmax.f32 %v1351, 0.0
        %v1354 = vmax.f32 %v1352, 0.0
        %vm1355 = vcmask 130048
        %v1357 = vsel %vm1355, %v424, 0
        %1359 = vmatpush.msra.mxu0 0.0
        %1360 = vmatpush.msra.mxu0 0.0
        %1361 = vmatpush.msra.mxu0 0.0
        %1362 = vmatpush.msra.mxu0 0.0
        %1363 = vmatpush.msra.mxu0 0.0
        %1364 = vmatpush.msra.mxu0 0.0
        %1365 = vmatpush.msra.mxu0 0.0
        %1366 = vmatpush.msra.mxu0 0.0
        %1367 = vmatpush.msra.mxu0 0.0
        %1368 = vmatpush.msra.mxu0 0.0
        %1369 = vmatpush.msra.mxu0 0.0
        %1370 = vmatpush.msra.mxu0 0.0
        %1371 = vmatpush.msra.mxu0 0.0
        %1372 = vmatpush.msra.mxu0 0.0
        %1373 = vmatpush.msra.mxu0 %v1354
        %1374 = vmatpush.msra.mxu0 %v1353
        %1375 = vmatmul.f32.gmra.mxu0 %v1357
        %v1376 = vpop.f32.mrf.mxu0
        %v1377 = vadd.f32 0.0, %v1376
        %1378 = vdwg.mxu0
        %1379 = vst [vmem:[%s288] sm:$0xf] %v1377
        %s1380 = sand.u32 %s182, 1
        %s1381 = scalar_lea.sflag [#allocation4], %s1380
        %s1382 = sand.u32 %s182, 1
        %s1383 = smul.addr %s1382, 4
        %s1384 = scalar_lea.vmem [#allocation5], %s1383
        // Predicated region
        $region53: #{tpu_custom_call.1} parent=47 // pred_check
          %p1385 = pneg %p192
        $region54: #{tpu_custom_call.1} parent=47 // pred_check_branch
          %1387 = sbr.rel (%p1385) target = $region56
        $region55: #{tpu_custom_call.1} parent=47 // pred_region
          %1389 = vsyncadd %s1381, 0
          %s1390 = smul.addr %s22, 4
          %s1391 = scalar_lea.hbm %s7, %s1390
          %s1393 = sshll.u32 %s1384, 4
          %s1394 = int_to_ptr.vmem [resolvable:$true] %s1393
          %s1395 = sshll.u32 %s1391, 4
          %s1396 = int_to_ptr.hbm [resolvable:$true] %s1395
          %1398 = dma.vmem_to_hbm [thread:$0]  %s1394, 64, %s1396, %s1381
        $region56: #{tpu_custom_call.1} parent=47 // pred_fallthru
          _
      $region48: #{tpu_custom_call.1} parent=5 // pred_fallthru
        _
      %p1399 = scmp.le.s32.totalorder 2, %s17
      // Predicated region
      $region57: #{tpu_custom_call.1} parent=5 // pred_check
        %p1400 = pneg %p1399
      $region58: #{tpu_custom_call.1} parent=5 // pred_check_branch
        %1402 = sbr.rel (%p1400) target = $region60
      $region59: #{tpu_custom_call.1} parent=5 // pred_region
        %s1403 = ssub.s32 %s17, 2
        // Predicated region
        $region61: #{tpu_custom_call.1} parent=59 // pred_check
          %p1404 = pneg %p198
        $region62: #{tpu_custom_call.1} parent=59 // pred_check_branch
          %1406 = sbr.rel (%p1404) target = $region64
        $region63: #{tpu_custom_call.1} parent=59 // pred_region
          %s1407 = sand.u32 %s183, 1
          %s1408 = scalar_lea.sflag [#allocation4], %s1407
          %s1409 = sand.u32 %s183, 1
          %s1410 = smul.addr %s1409, 4
          %s1411 = scalar_lea.vmem [#allocation5], %s1410
          %1413 = dma.done %s1408, 64
        $region64: #{tpu_custom_call.1} parent=59 // pred_fallthru
          _
      $region60: #{tpu_custom_call.1} parent=5 // pred_fallthru
        _
    $region6: #{tpu_custom_call.1} parent=1 // loop_footer
      %s21 = sadd.s32 1, %s17
    $region7: #{tpu_custom_call.1} parent=1 // loop_footer_branch
      %16 = sbr.rel target = $region3
    $region8: #{tpu_custom_call.1} parent=1 // loop_exit
      _
    %1414 = vsyncpa [#allocation3], 1
    %s1415 = scalar_lea.sflag [#allocation3], 1
    %1416 = vsyncpa %s1415, 1
    %1417 = vsyncpa [#allocation4], 1
    %s1418 = scalar_lea.sflag [#allocation4], 1
    %1419 = vsyncpa %s1418, 1

</llo_original>
